<compile_context>
chip_gen: v5e
topology: v5e:2x2
jax: 0.10.0
libtpu: 0.0.40
codegen_flags: <defaults>
</compile_context>

<pallas_src>
import jax
import jax.numpy as jnp
from jax import lax
from jax.experimental import pallas as pl
from jax.experimental.pallas import tpu as pltpu

# ----- scaled-down model dimensions (original value in comments) -----
B    = 8     # batch
TS   = 8     # ViT tokens                      (orig 197)
DS   = 32    # ViT embedding dim               (orig 768)
TM   = 8     # mfcc frames                     (orig 300)
FM   = 16    # mfcc features / LSTM input      (orig 40)
H    = 32    # LSTM hidden size                (orig 256; orig gate slices are 128-lane aligned)
TW   = 8     # wav2vec2 frames = att out dim   (orig 149)
DW   = 32    # wav2vec2 hidden dim             (orig 768)
DP   = 128   # post_* projection dim           (orig 128)
NCLS = 4     # classes

SPEC_FLAT = TS * DS        # orig 151296 = 197 * 768
MFCC_FLAT = TM * 2 * H     # orig 153600 = 300 * 512

# K-streaming tile for the two big FC layers.  At the original sizes
# (151296 / 153600) a 4096-row bf16 weight tile (~1 MB per layer per step)
# amortizes the ~0.35 us/grid-step pipeline overhead (the old layout was 300
# steps of ~192 KiB); at the scaled demo sizes a 128-row tile exercises the
# same multi-tile path.
K_TILE  = 4096 if max(SPEC_FLAT, MFCC_FLAT) > 4096 else 128
NK_SPEC = -(-SPEC_FLAT // K_TILE)
NK_MFCC = -(-MFCC_FLAT // K_TILE)
NK_GRID = max(NK_SPEC, NK_MFCC)


# =========================================================================
# Kernel A: L2-normalize + 2-layer bidirectional LSTM (time-major rows)
# =========================================================================
def lstm_kernel(x_ref,
                w_ih0f_ref, w_hh0f_ref, b0f_ref,
                w_ih0b_ref, w_hh0b_ref, b0b_ref,
                w_ih1ft_ref, w_ih1fb_ref, w_hh1f_ref, b1f_ref,
                w_ih1bt_ref, w_ih1bb_ref, w_hh1b_ref, b1b_ref,
                h1f_ref, h1b_ref,
                xpf, xpb, hf_buf, hb_buf):
    """x_ref: [TM*B, FM] f32 with row r = t*B + b (time-major).

    All weight matrices arrive bf16 (MXU bf16, f32 accumulation); gate
    pre-activations / cell math stay f32.  xpf/xpb hold the hoisted input
    projections and are REUSED by layer 1 (the layer-0 copies are dead once
    its recurrence has run); hf_buf/hb_buf hold layer-0 h_t, then are reused
    as layer-1 staging before one full-buffer bf16 cast into the outputs.
    """
    # ---- audio_mfcc = F.normalize(audio_mfcc, p=2, dim=2)  (rsqrt -> EUP) ----
    x = x_ref[...]
    sumsq = jnp.sum(x * x, axis=-1, keepdims=True)
    xn = (x * lax.rsqrt(jnp.maximum(sumsq, 1e-24))).astype(jnp.bfloat16)  # == x / max(||x||2, 1e-12)

    # ---- hoisted input projections: one bf16 MXU GEMM per direction, bias folded once ----
    xpf[...] = jnp.dot(xn, w_ih0f_ref[...], preferred_element_type=jnp.float32) + b0f_ref[...]
    xpb[...] = jnp.dot(xn, w_ih0b_ref[...], preferred_element_type=jnp.float32) + b0b_ref[...]

    def cell(gates, c):
        # PyTorch gate order (i, f, g, o).  At original H=256 these slices are
        # 128-lane aligned; the scaled H here is only a toy size.
        i = jax.nn.sigmoid(gates[:, 0 * H:1 * H])
        f = jax.nn.sigmoid(gates[:, 1 * H:2 * H])
        g = jnp.tanh(gates[:, 2 * H:3 * H])
        o = jax.nn.sigmoid(gates[:, 3 * H:4 * H])
        c = f * c + i * g
        return o * jnp.tanh(c), c

    def run_bidir_layer(w_hh_f, w_hh_b):
        # Forward and backward directions fused into one serial fori_loop.
        # TODO(synk): on v7x the two directions could run on separate
        # TensorCores via pl.core_map; kept single-core for portability.
        def step(s, carry):
            hf, cf, hb, cb = carry
            rf = pl.multiple_of(s * B, B)
            rb = pl.multiple_of((TM - 1 - s) * B, B)
            gf = xpf[pl.ds(rf, B), :] + jnp.dot(hf.astype(jnp.bfloat16), w_hh_f,
                                                preferred_element_type=jnp.float32)
            gb = xpb[pl.ds(rb, B), :] + jnp.dot(hb.astype(jnp.bfloat16), w_hh_b,
                                                preferred_element_type=jnp.float32)
            hf, cf = cell(gf, cf)
            hb, cb = cell(gb, cb)
            hf_buf[pl.ds(rf, B), :] = hf
            hb_buf[pl.ds(rb, B), :] = hb
            return hf, cf, hb, cb

        z = jnp.zeros((B, H), jnp.float32)
        lax.fori_loop(0, TM, step, (z, z, z, z))

    # ---- layer 0 ----
    run_bidir_layer(w_hh0f_ref[...], w_hh0b_ref[...])

    # ---- layer 1 input projection; fwd/bwd concat avoided by splitting w_ih rows ----
    # (inter-layer dropout p=0.5 is identity in eval mode)
    h0f_all = hf_buf[...].astype(jnp.bfloat16)
    h0b_all = hb_buf[...].astype(jnp.bfloat16)
    xpf[...] = (jnp.dot(h0f_all, w_ih1ft_ref[...], preferred_element_type=jnp.float32)
                + jnp.dot(h0b_all, w_ih1fb_ref[...], preferred_element_type=jnp.float32)
                + b1f_ref[...])
    xpb[...] = (jnp.dot(h0f_all, w_ih1bt_ref[...], preferred_element_type=jnp.float32)
                + jnp.dot(h0b_all, w_ih1bb_ref[...], preferred_element_type=jnp.float32)
                + b1b_ref[...])

    # ---- layer 1, then one full-buffer bf16 cast into the kernel outputs ----
    run_bidir_layer(w_hh1f_ref[...], w_hh1b_ref[...])
    h1f_ref[...] = hf_buf[...].astype(jnp.bfloat16)
    h1b_ref[...] = hb_buf[...].astype(jnp.bfloat16)


# =========================================================================
# Kernel B: K-streamed post_spec / post_mfcc projections + attention head
# =========================================================================
def head_kernel(xs_ref, ws_ref, xm_ref, wm_ref,
                b_spec_ref, b_mfcc_ref,
                wav_ref, w_att_a_ref, w_att_b_ref, b_att_ref,
                w_wav_ref, b_wav_ref,
                w1a_ref, w1b_ref, w1c_ref, b1_ref,
                w2_ref, b2_ref, w3_ref, b3_ref,
                f1_ref, f2_ref, f3_ref, f4_ref,
                acc_spec, acc_mfcc):
    k = pl.program_id(0)

    @pl.when(k == 0)
    def _init():
        acc_spec[...] = jnp.zeros_like(acc_spec)
        acc_mfcc[...] = jnp.zeros_like(acc_mfcc)

    def _maybe(n_tiles, fn):
        if n_tiles == NK_GRID:     # static: every grid step carries a valid tile
            fn()
        else:                      # general case (tile counts differ)
            pl.when(k < n_tiles)(fn)

    # ---- K-streamed post_spec_layer: acc += x_tile[B,KT] @ W_tile[KT,DP] (bf16 MXU, f32 acc) ----
    def _acc_spec():
        acc_spec[...] += jnp.dot(xs_ref[...], ws_ref[...],
                                 preferred_element_type=jnp.float32)
    _maybe(NK_SPEC, _acc_spec)

    # ---- K-streamed post_mfcc_layer (flattened LSTM output, torch.flatten row order) ----
    def _acc_mfcc():
        acc_mfcc[...] += jnp.dot(xm_ref[...], wm_ref[...],
                                 preferred_element_type=jnp.float32)
    _maybe(NK_MFCC, _acc_mfcc)

    # ---- finalize: the rest of the head runs once at the last grid step ----
    @pl.when(k == NK_GRID - 1)
    def _finalize():
        spec_p = jax.nn.relu(acc_spec[...] + b_spec_ref[...])       # [B, DP]
        mfcc_p = jax.nn.relu(acc_mfcc[...] + b_mfcc_ref[...])       # [B, DP]

        # post_spec_mfcc_att_layer on cat([spec_p, mfcc_p]) as a split matmul (no concat)
        att_p = jax.nn.relu(
            jnp.dot(spec_p, w_att_a_ref[...], preferred_element_type=jnp.float32)
            + jnp.dot(mfcc_p, w_att_b_ref[...], preferred_element_type=jnp.float32)
            + b_att_ref[...])                                       # [B, TW]

        # torch.matmul([B,1,TW], [B,TW,DW]) -> [B,DW] as VPU broadcast-multiply-reduce
        wav_pooled = jnp.sum(att_p[:, :, None] * wav_ref[...], axis=1)   # [B, DW]
        wav_p = jax.nn.relu(
            jnp.dot(wav_pooled, w_wav_ref[...], preferred_element_type=jnp.float32)
            + b_wav_ref[...])                                       # [B, DP]

        # fusion MLP; cat([spec_p, mfcc_p, wav_p]) expressed as split matmuls
        a1 = jax.nn.relu(
            jnp.dot(spec_p, w1a_ref[...], preferred_element_type=jnp.float32)
            + jnp.dot(mfcc_p, w1b_ref[...], preferred_element_type=jnp.float32)
            + jnp.dot(wav_p, w1c_ref[...], preferred_element_type=jnp.float32)
            + b1_ref[...])
        a2 = jax.nn.relu(jnp.dot(a1, w2_ref[...], preferred_element_type=jnp.float32)
                         + b2_ref[...])
        logits = jnp.dot(a2, w3_ref[...], preferred_element_type=jnp.float32) + b3_ref[...]

        f1_ref[...] = wav_p      # 'F1'
        f2_ref[...] = a1         # 'F2'
        f3_ref[...] = a2         # 'F3'
        f4_ref[...] = logits     # 'F4' (== 'M')


# =========================================================================
# Wrapper
# =========================================================================
def _vmem_limit_bytes():
    # Generation-aware VMEM limit (v5e/v6e: 128 MiB physical, v7x: 64 MiB).
    try:
        cap = getattr(pltpu.get_tpu_info(), "vmem_capacity_bytes", None)
        if cap:
            return int(cap * 3 // 4)
    except Exception:
        pass
    return 48 * 1024 * 1024


def ser_model_forward(audio_spec_feats, audio_mfcc, audio_wav_feats, p):
    vmem = pl.BlockSpec(memory_space=pltpu.MemorySpace.VMEM)
    vmem_lim = _vmem_limit_bytes()
    bf = lambda a: a.astype(jnp.bfloat16)

    # ================= kernel A: biLSTM over the mfcc stream =================
    # layout plumbing in the wrapper: time-major rows r = t*B + b
    mfcc2d = jnp.transpose(audio_mfcc, (1, 0, 2)).reshape(TM * B, FM)
    lstm_in = (
        mfcc2d,
        bf(p["w_ih_l0f"]), bf(p["w_hh_l0f"]), p["b_l0f"],
        bf(p["w_ih_l0b"]), bf(p["w_hh_l0b"]), p["b_l0b"],
        bf(p["w_ih_l1f"][:H]), bf(p["w_ih_l1f"][H:]), bf(p["w_hh_l1f"]), p["b_l1f"],
        bf(p["w_ih_l1b"][:H]), bf(p["w_ih_l1b"][H:]), bf(p["w_hh_l1b"]), p["b_l1b"],
    )
    h1f, h1b = pl.pallas_call(
        lstm_kernel,
        out_shape=(jax.ShapeDtypeStruct((TM * B, H), jnp.bfloat16),
                   jax.ShapeDtypeStruct((TM * B, H), jnp.bfloat16)),
        in_specs=[vmem] * len(lstm_in),
        out_specs=(vmem, vmem),
        scratch_shapes=[pltpu.VMEM((TM * B, 4 * H), jnp.float32),   # xp fwd (reused l0 -> l1)
                        pltpu.VMEM((TM * B, 4 * H), jnp.float32),   # xp bwd (reused l0 -> l1)
                        pltpu.VMEM((TM * B, H), jnp.float32),       # h fwd  (l0 h / l1 staging)
                        pltpu.VMEM((TM * B, H), jnp.float32)],      # h bwd  (l0 h / l1 staging)
        compiler_params=pltpu.CompilerParams(vmem_limit_bytes=vmem_lim),
    )(*lstm_in)

    # ================= kernel B: K-streamed projections + head =================
    # Layout plumbing (flatten / transpose / split / cast) stays in the wrapper.
    spec_flat = bf(audio_spec_feats.reshape(B, SPEC_FLAT))                    # [B, TS*DS] bf16
    h1f_b = jnp.transpose(h1f.reshape(TM, B, H), (1, 0, 2))                   # [B, TM, H]  bf16
    h1b_b = jnp.transpose(h1b.reshape(TM, B, H), (1, 0, 2))
    # torch.flatten order of the LSTM output: (t, [fwd H ; bwd H])
    mfcc_flat = jnp.concatenate([h1f_b, h1b_b], axis=-1).reshape(B, MFCC_FLAT)

    w_spec = bf(p["w_spec"])     # [SPEC_FLAT, DP], streamed bf16
    w_mfcc = bf(p["w_mfcc"])     # [MFCC_FLAT, DP], rows already in (t, dir, h) order
    w_att_a, w_att_b = p["w_att"][:DP], p["w_att"][DP:]
    w1a, w1b, w1c = p["w_fc1"][:DP], p["w_fc1"][DP:2 * DP], p["w_fc1"][2 * DP:]

    def pad_k(x_flat, w_full, n_tiles):
        kp = n_tiles * K_TILE
        k = x_flat.shape[1]
        if kp != k:   # zero-pad K so it tiles exactly (zeros contribute nothing)
            x_flat = jnp.pad(x_flat, ((0, 0), (0, kp - k)))
            w_full = jnp.pad(w_full, ((0, kp - k), (0, 0)))
        return x_flat, w_full

    spec_flat, w_spec = pad_k(spec_flat, w_spec, NK_SPEC)
    mfcc_flat, w_mfcc = pad_k(mfcc_flat, w_mfcc, NK_MFCC)

    def xmap(n_tiles):
        if n_tiles == NK_GRID:
            return lambda k: (0, k)
        return lambda k: (0, jnp.minimum(k, n_tiles - 1))

    def wmap(n_tiles):
        if n_tiles == NK_GRID:
            return lambda k: (k, 0)
        return lambda k: (jnp.minimum(k, n_tiles - 1), 0)

    grid_spec = pltpu.PrefetchScalarGridSpec(
        num_scalar_prefetch=0,
        grid=(NK_GRID,),
        in_specs=[
            pl.BlockSpec((B, K_TILE), xmap(NK_SPEC)),    # spec activation K-tile  (bf16)
            pl.BlockSpec((K_TILE, DP), wmap(NK_SPEC)),   # post_spec weight K-tile (bf16, streamed)
            pl.BlockSpec((B, K_TILE), xmap(NK_MFCC)),    # mfcc activation K-tile  (bf16)
            pl.BlockSpec((K_TILE, DP), wmap(NK_MFCC)),   # post_mfcc weight K-tile (bf16, streamed)
            vmem, vmem,                                   # b_spec, b_mfcc
            vmem,                                         # wav2vec2 features
            vmem, vmem, vmem,                             # w_att_a, w_att_b, b_att
            vmem, vmem,                                   # w_wav, b_wav
            vmem, vmem, vmem, vmem,                       # w1a, w1b, w1c, b1
            vmem, vmem, vmem, vmem,                       # w2, b2, w3, b3
        ],
        out_specs=(
            pl.BlockSpec((B, DP), lambda k: (0, 0)),
            pl.BlockSpec((B, DP), lambda k: (0, 0)),
            pl.BlockSpec((B, DP), lambda k: (0, 0)),
            pl.BlockSpec((B, NCLS), lambda k: (0, 0)),
        ),
        scratch_shapes=[pltpu.VMEM((B, DP), jnp.float32),
                        pltpu.VMEM((B, DP), jnp.float32)],
    )
    f1, f2, f3, f4 = pl.pallas_call(
        head_kernel,
        out_shape=(jax.ShapeDtypeStruct((B, DP), jnp.float32),
                   jax.ShapeDtypeStruct((B, DP), jnp.float32),
                   jax.ShapeDtypeStruct((B, DP), jnp.float32),
                   jax.ShapeDtypeStruct((B, NCLS), jnp.float32)),
        grid_spec=grid_spec,
        compiler_params=pltpu.CompilerParams(
            dimension_semantics=("arbitrary",),
            vmem_limit_bytes=vmem_lim),
    )(spec_flat, w_spec, mfcc_flat, w_mfcc,
      p["b_spec"], p["b_mfcc"],
      audio_wav_feats,
      w_att_a, w_att_b, p["b_att"],
      p["w_wav"], p["b_wav"],
      w1a, w1b, w1c, p["b_fc1"],
      p["w_fc2"], p["b_fc2"], p["w_fc3"], p["b_fc3"])

    return {"F1": f1, "F2": f2, "F3": f3, "F4": f4, "M": f4}


# =========================================================================
# Deterministic synthetic parameters (shapes per Ser_Model.__init__, scaled)
# =========================================================================
def init_params(key):
    ks = iter(jax.random.split(key, 32))

    def uni(shape, scale):
        return jax.random.uniform(next(ks), shape, jnp.float32, minval=-scale, maxval=scale)

    p = {}
    s = 1.0 / float(H) ** 0.5
    for layer, din in (("l0", FM), ("l1", 2 * H)):
        for d in ("f", "b"):
            p[f"w_ih_{layer}{d}"] = uni((din, 4 * H), s)
            p[f"w_hh_{layer}{d}"] = uni((H, 4 * H), s)
            # b_ih + b_hh folded into one bias (mathematically identical)
            p[f"b_{layer}{d}"] = uni((1, 4 * H), s)

    def lin(name, din, dout):
        sc = 1.0 / float(din) ** 0.5
        p[f"w_{name}"] = uni((din, dout), sc)
        p[f"b_{name}"] = uni((1, dout), sc)

    lin("spec", SPEC_FLAT, DP)    # post_spec_layer          (orig 151296 -> 128)
    lin("mfcc", MFCC_FLAT, DP)    # post_mfcc_layer          (orig 153600 -> 128)
    lin("att", 2 * DP, TW)        # post_spec_mfcc_att_layer (256 -> orig 149)
    lin("wav", DW, DP)            # post_wav_layer           (orig 768 -> 128)
    lin("fc1", 3 * DP, DP)        # post_att_layer_1         (384 -> 128)
    lin("fc2", DP, DP)            # post_att_layer_2         (128 -> 128)
    lin("fc3", DP, NCLS)          # post_att_layer_3         (128 -> 4)
    return p


if __name__ == "__main__":
    key = jax.random.PRNGKey(0)
    k_spec, k_mfcc, k_wav, k_params = jax.random.split(key, 4)

    # Stand-ins for the pretrained-backbone outputs + the raw mfcc input.
    audio_spec_feats = jax.random.normal(k_spec, (B, TS, DS), jnp.float32)  # ViT token features
    audio_mfcc = jax.random.normal(k_mfcc, (B, TM, FM), jnp.float32)        # raw mfcc
    audio_wav_feats = jax.random.normal(k_wav, (B, TW, DW), jnp.float32)    # wav2vec2 hidden states

    params = init_params(k_params)

    out = ser_model_forward(audio_spec_feats, audio_mfcc, audio_wav_feats, params)
    out = jax.tree_util.tree_map(jax.block_until_ready, out)

    assert out["F1"].shape == (B, DP)
    assert out["F2"].shape == (B, DP)
    assert out["F3"].shape == (B, DP)
    assert out["F4"].shape == (B, NCLS)
    print("KERNEL_OK")
</pallas_src>

<mosaic_0001>
module attributes {stable_mosaic.version = 11 : i64} {
  func.func @lstm_kernel(%arg0: memref<64x16xf32, #tpu.memory_space<vmem>>, %arg1: memref<16x128xbf16, #tpu.memory_space<vmem>>, %arg2: memref<32x128xbf16, #tpu.memory_space<vmem>>, %arg3: memref<1x128xf32, #tpu.memory_space<vmem>>, %arg4: memref<16x128xbf16, #tpu.memory_space<vmem>>, %arg5: memref<32x128xbf16, #tpu.memory_space<vmem>>, %arg6: memref<1x128xf32, #tpu.memory_space<vmem>>, %arg7: memref<32x128xbf16, #tpu.memory_space<vmem>>, %arg8: memref<32x128xbf16, #tpu.memory_space<vmem>>, %arg9: memref<32x128xbf16, #tpu.memory_space<vmem>>, %arg10: memref<1x128xf32, #tpu.memory_space<vmem>>, %arg11: memref<32x128xbf16, #tpu.memory_space<vmem>>, %arg12: memref<32x128xbf16, #tpu.memory_space<vmem>>, %arg13: memref<32x128xbf16, #tpu.memory_space<vmem>>, %arg14: memref<1x128xf32, #tpu.memory_space<vmem>>, %arg15: memref<64x32xbf16, #tpu.memory_space<vmem>>, %arg16: memref<64x32xbf16, #tpu.memory_space<vmem>>, %arg17: memref<64x128xf32, #tpu.memory_space<vmem>>, %arg18: memref<64x128xf32, #tpu.memory_space<vmem>>, %arg19: memref<64x32xf32, #tpu.memory_space<vmem>>, %arg20: memref<64x32xf32, #tpu.memory_space<vmem>>) attributes {dimension_semantics = [], scalar_prefetch = 0 : i64, scratch_operands = 4 : i64, tpu.core_type = #tpu.core_type<tc>} {
    %c0 = arith.constant 0 : index
    %c0_0 = arith.constant 0 : index
    %0 = vector.load %arg0[%c0, %c0_0] : memref<64x16xf32, #tpu.memory_space<vmem>>, vector<64x16xf32>
    %1 = arith.mulf %0, %0 : vector<64x16xf32>
    %cst = arith.constant dense<0.000000e+00> : vector<64xf32>
    %2 = vector.multi_reduction <add>, %1, %cst [1] : vector<64x16xf32> to vector<64xf32>
    %3 = vector.shape_cast %2 : vector<64xf32> to vector<64x1xf32>
    %cst_1 = arith.constant 1.000000e-24 : f32
    %4 = vector.broadcast %cst_1 : f32 to vector<64x1xf32>
    %5 = arith.maximumf %3, %4 : vector<64x1xf32>
    %6 = math.rsqrt %5 : vector<64x1xf32>
    %7 = vector.broadcast %6 : vector<64x1xf32> to vector<64x16xf32>
    %8 = arith.mulf %0, %7 : vector<64x16xf32>
    %9 = arith.truncf %8 : vector<64x16xf32> to vector<64x16xbf16>
    %c0_2 = arith.constant 0 : index
    %c0_3 = arith.constant 0 : index
    %10 = vector.load %arg1[%c0_2, %c0_3] : memref<16x128xbf16, #tpu.memory_space<vmem>>, vector<16x128xbf16>
    %cst_4 = arith.constant dense<0.000000e+00> : vector<64x128xf32>
    %11 = tpu.matmul %9, %10, %cst_4 {dimension_numbers = #tpu.dot_dimension_numbers<[1], [0], [0], [1], [0, 0, 1, 1], [], []>} : vector<64x16xbf16>, vector<16x128xbf16>, vector<64x128xf32> -> vector<64x128xf32>
    %c0_5 = arith.constant 0 : index
    %c0_6 = arith.constant 0 : index
    %12 = vector.load %arg3[%c0_5, %c0_6] : memref<1x128xf32, #tpu.memory_space<vmem>>, vector<1x128xf32>
    %13 = vector.broadcast %12 : vector<1x128xf32> to vector<64x128xf32>
    %14 = arith.addf %11, %13 : vector<64x128xf32>
    %c0_7 = arith.constant 0 : index
    %c0_8 = arith.constant 0 : index
    %15 = vector.load %arg17[%c0_7, %c0_8] : memref<64x128xf32, #tpu.memory_space<vmem>>, vector<64x128xf32>
    tpu.vector_store %arg17[%c0_7, %c0_8], %14 {strides = array<i32>} : memref<64x128xf32, #tpu.memory_space<vmem>>, vector<64x128xf32>,
    %c0_9 = arith.constant 0 : index
    %c0_10 = arith.constant 0 : index
    %16 = vector.load %arg4[%c0_9, %c0_10] : memref<16x128xbf16, #tpu.memory_space<vmem>>, vector<16x128xbf16>
    %cst_11 = arith.constant dense<0.000000e+00> : vector<64x128xf32>
    %17 = tpu.matmul %9, %16, %cst_11 {dimension_numbers = #tpu.dot_dimension_numbers<[1], [0], [0], [1], [0, 0, 1, 1], [], []>} : vector<64x16xbf16>, vector<16x128xbf16>, vector<64x128xf32> -> vector<64x128xf32>
    %c0_12 = arith.constant 0 : index
    %c0_13 = arith.constant 0 : index
    %18 = vector.load %arg6[%c0_12, %c0_13] : memref<1x128xf32, #tpu.memory_space<vmem>>, vector<1x128xf32>
    %19 = vector.broadcast %18 : vector<1x128xf32> to vector<64x128xf32>
    %20 = arith.addf %17, %19 : vector<64x128xf32>
    %c0_14 = arith.constant 0 : index
    %c0_15 = arith.constant 0 : index
    %21 = vector.load %arg18[%c0_14, %c0_15] : memref<64x128xf32, #tpu.memory_space<vmem>>, vector<64x128xf32>
    tpu.vector_store %arg18[%c0_14, %c0_15], %20 {strides = array<i32>} : memref<64x128xf32, #tpu.memory_space<vmem>>, vector<64x128xf32>,
    %c0_16 = arith.constant 0 : index
    %c0_17 = arith.constant 0 : index
    %22 = vector.load %arg2[%c0_16, %c0_17] : memref<32x128xbf16, #tpu.memory_space<vmem>>, vector<32x128xbf16>
    %c0_18 = arith.constant 0 : index
    %c0_19 = arith.constant 0 : index
    %23 = vector.load %arg5[%c0_18, %c0_19] : memref<32x128xbf16, #tpu.memory_space<vmem>>, vector<32x128xbf16>
    %cst_20 = arith.constant 0.000000e+00 : f32
    %24 = vector.broadcast %cst_20 : f32 to vector<8x32xf32>
    %c0_i32 = arith.constant 0 : i32
    %c8_i32 = arith.constant 8 : i32
    %25 = arith.addi %c0_i32, %c8_i32 : i32
    %c1_i32 = arith.constant 1 : i32
    %26:4 = scf.for %arg21 = %c0_i32 to %25 step %c1_i32 iter_args(%arg22 = %24, %arg23 = %24, %arg24 = %24, %arg25 = %24) -> (vector<8x32xf32>, vector<8x32xf32>, vector<8x32xf32>, vector<8x32xf32>)  : i32 {
      %c8_i32_63 = arith.constant 8 : i32
      %60 = arith.muli %arg21, %c8_i32_63 : i32
      %61 = tpu.assume_multiple %60, 8 : i32
      %c7_i32 = arith.constant 7 : i32
      %62 = arith.subi %c7_i32, %arg21 : i32
      %c8_i32_64 = arith.constant 8 : i32
      %63 = arith.muli %62, %c8_i32_64 : i32
      %64 = tpu.assume_multiple %63, 8 : i32
      %65 = arith.index_cast %61 : i32 to index
      %c0_65 = arith.constant 0 : index
      %66 = vector.load %arg17[%65, %c0_65] : memref<64x128xf32, #tpu.memory_space<vmem>>, vector<8x128xf32>
      %67 = arith.truncf %arg22 : vector<8x32xf32> to vector<8x32xbf16>
      %cst_66 = arith.constant dense<0.000000e+00> : vector<8x128xf32>
      %68 = tpu.matmul %67, %22, %cst_66 {dimension_numbers = #tpu.dot_dimension_numbers<[1], [0], [0], [1], [0, 0, 1, 1], [], []>} : vector<8x32xbf16>, vector<32x128xbf16>, vector<8x128xf32> -> vector<8x128xf32>
      %69 = arith.addf %66, %68 : vector<8x128xf32>
      %70 = arith.index_cast %64 : i32 to index
      %c0_67 = arith.constant 0 : index
      %71 = vector.load %arg18[%70, %c0_67] : memref<64x128xf32, #tpu.memory_space<vmem>>, vector<8x128xf32>
      %72 = arith.truncf %arg24 : vector<8x32xf32> to vector<8x32xbf16>
      %cst_68 = arith.constant dense<0.000000e+00> : vector<8x128xf32>
      %73 = tpu.matmul %72, %23, %cst_68 {dimension_numbers = #tpu.dot_dimension_numbers<[1], [0], [0], [1], [0, 0, 1, 1], [], []>} : vector<8x32xbf16>, vector<32x128xbf16>, vector<8x128xf32> -> vector<8x128xf32>
      %74 = arith.addf %71, %73 : vector<8x128xf32>
      %75 = vector.extract_strided_slice %69 {offsets = [0, 0], sizes = [8, 32], strides = [1, 1]} : vector<8x128xf32> to vector<8x32xf32>
      %76 = arith.negf %75 : vector<8x32xf32>
      %77 = math.exp %76 : vector<8x32xf32>
      %cst_69 = arith.constant 1.000000e+00 : f32
      %78 = vector.broadcast %cst_69 : f32 to vector<8x32xf32>
      %79 = arith.addf %78, %77 : vector<8x32xf32>
      %80 = arith.divf %78, %79 : vector<8x32xf32>
      %81 = vector.extract_strided_slice %69 {offsets = [0, 32], sizes = [8, 32], strides = [1, 1]} : vector<8x128xf32> to vector<8x32xf32>
      %82 = arith.negf %81 : vector<8x32xf32>
      %83 = math.exp %82 : vector<8x32xf32>
      %cst_70 = arith.constant 1.000000e+00 : f32
      %84 = vector.broadcast %cst_70 : f32 to vector<8x32xf32>
      %85 = arith.addf %84, %83 : vector<8x32xf32>
      %86 = arith.divf %84, %85 : vector<8x32xf32>
      %87 = vector.extract_strided_slice %69 {offsets = [0, 64], sizes = [8, 32], strides = [1, 1]} : vector<8x128xf32> to vector<8x32xf32>
      %88 = math.tanh %87 : vector<8x32xf32>
      %89 = vector.extract_strided_slice %69 {offsets = [0, 96], sizes = [8, 32], strides = [1, 1]} : vector<8x128xf32> to vector<8x32xf32>
      %90 = arith.negf %89 : vector<8x32xf32>
      %91 = math.exp %90 : vector<8x32xf32>
      %cst_71 = arith.constant 1.000000e+00 : f32
      %92 = vector.broadcast %cst_71 : f32 to vector<8x32xf32>
      %93 = arith.addf %92, %91 : vector<8x32xf32>
      %94 = arith.divf %92, %93 : vector<8x32xf32>
      %95 = arith.mulf %86, %arg23 : vector<8x32xf32>
      %96 = arith.mulf %80, %88 : vector<8x32xf32>
      %97 = arith.addf %95, %96 : vector<8x32xf32>
      %98 = math.tanh %97 : vector<8x32xf32>
      %99 = arith.mulf %94, %98 : vector<8x32xf32>
      %100 = vector.extract_strided_slice %74 {offsets = [0, 0], sizes = [8, 32], strides = [1, 1]} : vector<8x128xf32> to vector<8x32xf32>
      %101 = arith.negf %100 : vector<8x32xf32>
      %102 = math.exp %101 : vector<8x32xf32>
      %cst_72 = arith.constant 1.000000e+00 : f32
      %103 = vector.broadcast %cst_72 : f32 to vector<8x32xf32>
      %104 = arith.addf %103, %102 : vector<8x32xf32>
      %105 = arith.divf %103, %104 : vector<8x32xf32>
      %106 = vector.extract_strided_slice %74 {offsets = [0, 32], sizes = [8, 32], strides = [1, 1]} : vector<8x128xf32> to vector<8x32xf32>
      %107 = arith.negf %106 : vector<8x32xf32>
      %108 = math.exp %107 : vector<8x32xf32>
      %cst_73 = arith.constant 1.000000e+00 : f32
      %109 = vector.broadcast %cst_73 : f32 to vector<8x32xf32>
      %110 = arith.addf %109, %108 : vector<8x32xf32>
      %111 = arith.divf %109, %110 : vector<8x32xf32>
      %112 = vector.extract_strided_slice %74 {offsets = [0, 64], sizes = [8, 32], strides = [1, 1]} : vector<8x128xf32> to vector<8x32xf32>
      %113 = math.tanh %112 : vector<8x32xf32>
      %114 = vector.extract_strided_slice %74 {offsets = [0, 96], sizes = [8, 32], strides = [1, 1]} : vector<8x128xf32> to vector<8x32xf32>
      %115 = arith.negf %114 : vector<8x32xf32>
      %116 = math.exp %115 : vector<8x32xf32>
      %cst_74 = arith.constant 1.000000e+00 : f32
      %117 = vector.broadcast %cst_74 : f32 to vector<8x32xf32>
      %118 = arith.addf %117, %116 : vector<8x32xf32>
      %119 = arith.divf %117, %118 : vector<8x32xf32>
      %120 = arith.mulf %111, %arg25 : vector<8x32xf32>
      %121 = arith.mulf %105, %113 : vector<8x32xf32>
      %122 = arith.addf %120, %121 : vector<8x32xf32>
      %123 = math.tanh %122 : vector<8x32xf32>
      %124 = arith.mulf %119, %123 : vector<8x32xf32>
      %125 = arith.index_cast %61 : i32 to index
      %c0_75 = arith.constant 0 : index
      %126 = vector.load %arg19[%125, %c0_75] : memref<64x32xf32, #tpu.memory_space<vmem>>, vector<8x32xf32>
      tpu.vector_store %arg19[%125, %c0_75], %99 {strides = array<i32>} : memref<64x32xf32, #tpu.memory_space<vmem>>, vector<8x32xf32>,
      %127 = arith.index_cast %64 : i32 to index
      %c0_76 = arith.constant 0 : index
      %128 = vector.load %arg20[%127, %c0_76] : memref<64x32xf32, #tpu.memory_space<vmem>>, vector<8x32xf32>
      tpu.vector_store %arg20[%127, %c0_76], %124 {strides = array<i32>} : memref<64x32xf32, #tpu.memory_space<vmem>>, vector<8x32xf32>,
      scf.yield %99, %97, %124, %122 : vector<8x32xf32>, vector<8x32xf32>, vector<8x32xf32>, vector<8x32xf32>
    }
    %c8_i32_21 = arith.constant 8 : i32
    %c0_22 = arith.constant 0 : index
    %c0_23 = arith.constant 0 : index
    %27 = vector.load %arg19[%c0_22, %c0_23] : memref<64x32xf32, #tpu.memory_space<vmem>>, vector<64x32xf32>
    %28 = arith.truncf %27 : vector<64x32xf32> to vector<64x32xbf16>
    %c0_24 = arith.constant 0 : index
    %c0_25 = arith.constant 0 : index
    %29 = vector.load %arg20[%c0_24, %c0_25] : memref<64x32xf32, #tpu.memory_space<vmem>>, vector<64x32xf32>
    %30 = arith.truncf %29 : vector<64x32xf32> to vector<64x32xbf16>
    %c0_26 = arith.constant 0 : index
    %c0_27 = arith.constant 0 : index
    %31 = vector.load %arg7[%c0_26, %c0_27] : memref<32x128xbf16, #tpu.memory_space<vmem>>, vector<32x128xbf16>
    %cst_28 = arith.constant dense<0.000000e+00> : vector<64x128xf32>
    %32 = tpu.matmul %28, %31, %cst_28 {dimension_numbers = #tpu.dot_dimension_numbers<[1], [0], [0], [1], [0, 0, 1, 1], [], []>} : vector<64x32xbf16>, vector<32x128xbf16>, vector<64x128xf32> -> vector<64x128xf32>
    %c0_29 = arith.constant 0 : index
    %c0_30 = arith.constant 0 : index
    %33 = vector.load %arg8[%c0_29, %c0_30] : memref<32x128xbf16, #tpu.memory_space<vmem>>, vector<32x128xbf16>
    %cst_31 = arith.constant dense<0.000000e+00> : vector<64x128xf32>
    %34 = tpu.matmul %30, %33, %cst_31 {dimension_numbers = #tpu.dot_dimension_numbers<[1], [0], [0], [1], [0, 0, 1, 1], [], []>} : vector<64x32xbf16>, vector<32x128xbf16>, vector<64x128xf32> -> vector<64x128xf32>
    %35 = arith.addf %32, %34 : vector<64x128xf32>
    %c0_32 = arith.constant 0 : index
    %c0_33 = arith.constant 0 : index
    %36 = vector.load %arg10[%c0_32, %c0_33] : memref<1x128xf32, #tpu.memory_space<vmem>>, vector<1x128xf32>
    %37 = vector.broadcast %36 : vector<1x128xf32> to vector<64x128xf32>
    %38 = arith.addf %35, %37 : vector<64x128xf32>
    %c0_34 = arith.constant 0 : index
    %c0_35 = arith.constant 0 : index
    %39 = vector.load %arg17[%c0_34, %c0_35] : memref<64x128xf32, #tpu.memory_space<vmem>>, vector<64x128xf32>
    tpu.vector_store %arg17[%c0_34, %c0_35], %38 {strides = array<i32>} : memref<64x128xf32, #tpu.memory_space<vmem>>, vector<64x128xf32>,
    %c0_36 = arith.constant 0 : index
    %c0_37 = arith.constant 0 : index
    %40 = vector.load %arg11[%c0_36, %c0_37] : memref<32x128xbf16, #tpu.memory_space<vmem>>, vector<32x128xbf16>
    %cst_38 = arith.constant dense<0.000000e+00> : vector<64x128xf32>
    %41 = tpu.matmul %28, %40, %cst_38 {dimension_numbers = #tpu.dot_dimension_numbers<[1], [0], [0], [1], [0, 0, 1, 1], [], []>} : vector<64x32xbf16>, vector<32x128xbf16>, vector<64x128xf32> -> vector<64x128xf32>
    %c0_39 = arith.constant 0 : index
    %c0_40 = arith.constant 0 : index
    %42 = vector.load %arg12[%c0_39, %c0_40] : memref<32x128xbf16, #tpu.memory_space<vmem>>, vector<32x128xbf16>
    %cst_41 = arith.constant dense<0.000000e+00> : vector<64x128xf32>
    %43 = tpu.matmul %30, %42, %cst_41 {dimension_numbers = #tpu.dot_dimension_numbers<[1], [0], [0], [1], [0, 0, 1, 1], [], []>} : vector<64x32xbf16>, vector<32x128xbf16>, vector<64x128xf32> -> vector<64x128xf32>
    %44 = arith.addf %41, %43 : vector<64x128xf32>
    %c0_42 = arith.constant 0 : index
    %c0_43 = arith.constant 0 : index
    %45 = vector.load %arg14[%c0_42, %c0_43] : memref<1x128xf32, #tpu.memory_space<vmem>>, vector<1x128xf32>
    %46 = vector.broadcast %45 : vector<1x128xf32> to vector<64x128xf32>
    %47 = arith.addf %44, %46 : vector<64x128xf32>
    %c0_44 = arith.constant 0 : index
    %c0_45 = arith.constant 0 : index
    %48 = vector.load %arg18[%c0_44, %c0_45] : memref<64x128xf32, #tpu.memory_space<vmem>>, vector<64x128xf32>
    tpu.vector_store %arg18[%c0_44, %c0_45], %47 {strides = array<i32>} : memref<64x128xf32, #tpu.memory_space<vmem>>, vector<64x128xf32>,
    %c0_46 = arith.constant 0 : index
    %c0_47 = arith.constant 0 : index
    %49 = vector.load %arg9[%c0_46, %c0_47] : memref<32x128xbf16, #tpu.memory_space<vmem>>, vector<32x128xbf16>
    %c0_48 = arith.constant 0 : index
    %c0_49 = arith.constant 0 : index
    %50 = vector.load %arg13[%c0_48, %c0_49] : memref<32x128xbf16, #tpu.memory_space<vmem>>, vector<32x128xbf16>
    %cst_50 = arith.constant 0.000000e+00 : f32
    %51 = vector.broadcast %cst_50 : f32 to vector<8x32xf32>
    %c0_i32_51 = arith.constant 0 : i32
    %c8_i32_52 = arith.constant 8 : i32
    %52 = arith.addi %c0_i32_51, %c8_i32_52 : i32
    %c1_i32_53 = arith.constant 1 : i32
    %53:4 = scf.for %arg21 = %c0_i32_51 to %52 step %c1_i32_53 iter_args(%arg22 = %51, %arg23 = %51, %arg24 = %51, %arg25 = %51) -> (vector<8x32xf32>, vector<8x32xf32>, vector<8x32xf32>, vector<8x32xf32>)  : i32 {
      %c8_i32_63 = arith.constant 8 : i32
      %60 = arith.muli %arg21, %c8_i32_63 : i32
      %61 = tpu.assume_multiple %60, 8 : i32
      %c7_i32 = arith.constant 7 : i32
      %62 = arith.subi %c7_i32, %arg21 : i32
      %c8_i32_64 = arith.constant 8 : i32
      %63 = arith.muli %62, %c8_i32_64 : i32
      %64 = tpu.assume_multiple %63, 8 : i32
      %65 = arith.index_cast %61 : i32 to index
      %c0_65 = arith.constant 0 : index
      %66 = vector.load %arg17[%65, %c0_65] : memref<64x128xf32, #tpu.memory_space<vmem>>, vector<8x128xf32>
      %67 = arith.truncf %arg22 : vector<8x32xf32> to vector<8x32xbf16>
      %cst_66 = arith.constant dense<0.000000e+00> : vector<8x128xf32>
      %68 = tpu.matmul %67, %49, %cst_66 {dimension_numbers = #tpu.dot_dimension_numbers<[1], [0], [0], [1], [0, 0, 1, 1], [], []>} : vector<8x32xbf16>, vector<32x128xbf16>, vector<8x128xf32> -> vector<8x128xf32>
      %69 = arith.addf %66, %68 : vector<8x128xf32>
      %70 = arith.index_cast %64 : i32 to index
      %c0_67 = arith.constant 0 : index
      %71 = vector.load %arg18[%70, %c0_67] : memref<64x128xf32, #tpu.memory_space<vmem>>, vector<8x128xf32>
      %72 = arith.truncf %arg24 : vector<8x32xf32> to vector<8x32xbf16>
      %cst_68 = arith.constant dense<0.000000e+00> : vector<8x128xf32>
      %73 = tpu.matmul %72, %50, %cst_68 {dimension_numbers = #tpu.dot_dimension_numbers<[1], [0], [0], [1], [0, 0, 1, 1], [], []>} : vector<8x32xbf16>, vector<32x128xbf16>, vector<8x128xf32> -> vector<8x128xf32>
      %74 = arith.addf %71, %73 : vector<8x128xf32>
      %75 = vector.extract_strided_slice %69 {offsets = [0, 0], sizes = [8, 32], strides = [1, 1]} : vector<8x128xf32> to vector<8x32xf32>
      %76 = arith.negf %75 : vector<8x32xf32>
      %77 = math.exp %76 : vector<8x32xf32>
      %cst_69 = arith.constant 1.000000e+00 : f32
      %78 = vector.broadcast %cst_69 : f32 to vector<8x32xf32>
      %79 = arith.addf %78, %77 : vector<8x32xf32>
      %80 = arith.divf %78, %79 : vector<8x32xf32>
      %81 = vector.extract_strided_slice %69 {offsets = [0, 32], sizes = [8, 32], strides = [1, 1]} : vector<8x128xf32> to vector<8x32xf32>
      %82 = arith.negf %81 : vector<8x32xf32>
      %83 = math.exp %82 : vector<8x32xf32>
      %cst_70 = arith.constant 1.000000e+00 : f32
      %84 = vector.broadcast %cst_70 : f32 to vector<8x32xf32>
      %85 = arith.addf %84, %83 : vector<8x32xf32>
      %86 = arith.divf %84, %85 : vector<8x32xf32>
      %87 = vector.extract_strided_slice %69 {offsets = [0, 64], sizes = [8, 32], strides = [1, 1]} : vector<8x128xf32> to vector<8x32xf32>
      %88 = math.tanh %87 : vector<8x32xf32>
      %89 = vector.extract_strided_slice %69 {offsets = [0, 96], sizes = [8, 32], strides = [1, 1]} : vector<8x128xf32> to vector<8x32xf32>
      %90 = arith.negf %89 : vector<8x32xf32>
      %91 = math.exp %90 : vector<8x32xf32>
      %cst_71 = arith.constant 1.000000e+00 : f32
      %92 = vector.broadcast %cst_71 : f32 to vector<8x32xf32>
      %93 = arith.addf %92, %91 : vector<8x32xf32>
      %94 = arith.divf %92, %93 : vector<8x32xf32>
      %95 = arith.mulf %86, %arg23 : vector<8x32xf32>
      %96 = arith.mulf %80, %88 : vector<8x32xf32>
      %97 = arith.addf %95, %96 : vector<8x32xf32>
      %98 = math.tanh %97 : vector<8x32xf32>
      %99 = arith.mulf %94, %98 : vector<8x32xf32>
      %100 = vector.extract_strided_slice %74 {offsets = [0, 0], sizes = [8, 32], strides = [1, 1]} : vector<8x128xf32> to vector<8x32xf32>
      %101 = arith.negf %100 : vector<8x32xf32>
      %102 = math.exp %101 : vector<8x32xf32>
      %cst_72 = arith.constant 1.000000e+00 : f32
      %103 = vector.broadcast %cst_72 : f32 to vector<8x32xf32>
      %104 = arith.addf %103, %102 : vector<8x32xf32>
      %105 = arith.divf %103, %104 : vector<8x32xf32>
      %106 = vector.extract_strided_slice %74 {offsets = [0, 32], sizes = [8, 32], strides = [1, 1]} : vector<8x128xf32> to vector<8x32xf32>
      %107 = arith.negf %106 : vector<8x32xf32>
      %108 = math.exp %107 : vector<8x32xf32>
      %cst_73 = arith.constant 1.000000e+00 : f32
      %109 = vector.broadcast %cst_73 : f32 to vector<8x32xf32>
      %110 = arith.addf %109, %108 : vector<8x32xf32>
      %111 = arith.divf %109, %110 : vector<8x32xf32>
      %112 = vector.extract_strided_slice %74 {offsets = [0, 64], sizes = [8, 32], strides = [1, 1]} : vector<8x128xf32> to vector<8x32xf32>
      %113 = math.tanh %112 : vector<8x32xf32>
      %114 = vector.extract_strided_slice %74 {offsets = [0, 96], sizes = [8, 32], strides = [1, 1]} : vector<8x128xf32> to vector<8x32xf32>
      %115 = arith.negf %114 : vector<8x32xf32>
      %116 = math.exp %115 : vector<8x32xf32>
      %cst_74 = arith.constant 1.000000e+00 : f32
      %117 = vector.broadcast %cst_74 : f32 to vector<8x32xf32>
      %118 = arith.addf %117, %116 : vector<8x32xf32>
      %119 = arith.divf %117, %118 : vector<8x32xf32>
      %120 = arith.mulf %111, %arg25 : vector<8x32xf32>
      %121 = arith.mulf %105, %113 : vector<8x32xf32>
      %122 = arith.addf %120, %121 : vector<8x32xf32>
      %123 = math.tanh %122 : vector<8x32xf32>
      %124 = arith.mulf %119, %123 : vector<8x32xf32>
      %125 = arith.index_cast %61 : i32 to index
      %c0_75 = arith.constant 0 : index
      %126 = vector.load %arg19[%125, %c0_75] : memref<64x32xf32, #tpu.memory_space<vmem>>, vector<8x32xf32>
      tpu.vector_store %arg19[%125, %c0_75], %99 {strides = array<i32>} : memref<64x32xf32, #tpu.memory_space<vmem>>, vector<8x32xf32>,
      %127 = arith.index_cast %64 : i32 to index
      %c0_76 = arith.constant 0 : index
      %128 = vector.load %arg20[%127, %c0_76] : memref<64x32xf32, #tpu.memory_space<vmem>>, vector<8x32xf32>
      tpu.vector_store %arg20[%127, %c0_76], %124 {strides = array<i32>} : memref<64x32xf32, #tpu.memory_space<vmem>>, vector<8x32xf32>,
      scf.yield %99, %97, %124, %122 : vector<8x32xf32>, vector<8x32xf32>, vector<8x32xf32>, vector<8x32xf32>
    }
    %c8_i32_54 = arith.constant 8 : i32
    %c0_55 = arith.constant 0 : index
    %c0_56 = arith.constant 0 : index
    %54 = vector.load %arg19[%c0_55, %c0_56] : memref<64x32xf32, #tpu.memory_space<vmem>>, vector<64x32xf32>
    %55 = arith.truncf %54 : vector<64x32xf32> to vector<64x32xbf16>
    %c0_57 = arith.constant 0 : index
    %c0_58 = arith.constant 0 : index
    %56 = vector.load %arg15[%c0_57, %c0_58] : memref<64x32xbf16, #tpu.memory_space<vmem>>, vector<64x32xbf16>
    tpu.vector_store %arg15[%c0_57, %c0_58], %55 {strides = array<i32>} : memref<64x32xbf16, #tpu.memory_space<vmem>>, vector<64x32xbf16>,
    %c0_59 = arith.constant 0 : index
    %c0_60 = arith.constant 0 : index
    %57 = vector.load %arg20[%c0_59, %c0_60] : memref<64x32xf32, #tpu.memory_space<vmem>>, vector<64x32xf32>
    %58 = arith.truncf %57 : vector<64x32xf32> to vector<64x32xbf16>
    %c0_61 = arith.constant 0 : index
    %c0_62 = arith.constant 0 : index
    %59 = vector.load %arg16[%c0_61, %c0_62] : memref<64x32xbf16, #tpu.memory_space<vmem>>, vector<64x32xbf16>
    tpu.vector_store %arg16[%c0_61, %c0_62], %58 {strides = array<i32>} : memref<64x32xbf16, #tpu.memory_space<vmem>>, vector<64x32xbf16>,
    return
  }
}

</mosaic_0001>

<llo_original>
// kernel: tpu_custom_call.1
$region0: #{tpu_custom_call.1}
  #allocation0 [shape = 'u32[]', space=smem, size = 0x4, offset = 0x4, fixed_abs, tag = 'smem constant byte address 0x4 - core index']
  #allocation1 [shape = 'u32[72,128]{1,0:T(1,128)}', space=vmem, size = 0x9000, scoped, tag = 'internal scratch']
  #allocation2 [shape = 'f32[64,128]{1,0:T(8,128)}', space=vmem, size = 0x8000, scoped, tag = 'scratch operand']
  #allocation3 [shape = 'f32[64,128]{1,0:T(8,128)}', space=vmem, size = 0x8000, scoped, tag = 'scratch operand']
  #allocation4 [shape = 'f32[64,32]{1,0:T(8,128)}', space=vmem, size = 0x8000, scoped, tag = 'scratch operand']
  #allocation5 [shape = 'f32[64,32]{1,0:T(8,128)}', space=vmem, size = 0x8000, scoped, tag = 'scratch operand']
  %s0 = inlined_call_operand.vmem [shape: f32[64,16], index: 0, kind: input, shape index: {}]
  %s1 = inlined_call_operand.hbm [shape: bf16[16,128], index: 1, kind: input, shape index: {}]
  %s2 = inlined_call_operand.vmem [shape: bf16[32,128], index: 2, kind: input, shape index: {}]
  %s3 = inlined_call_operand.vmem [shape: f32[1,128], index: 3, kind: input, shape index: {}]
  %s4 = inlined_call_operand.hbm [shape: bf16[16,128], index: 4, kind: input, shape index: {}]
  %s5 = inlined_call_operand.vmem [shape: bf16[32,128], index: 5, kind: input, shape index: {}]
  %s6 = inlined_call_operand.vmem [shape: f32[1,128], index: 6, kind: input, shape index: {}]
  %s7 = inlined_call_operand.vmem [shape: bf16[32,128], index: 7, kind: input, shape index: {}]
  %s8 = inlined_call_operand.vmem [shape: bf16[32,128], index: 8, kind: input, shape index: {}]
  %s9 = inlined_call_operand.vmem [shape: bf16[32,128], index: 9, kind: input, shape index: {}]
  %s10 = inlined_call_operand.vmem [shape: f32[1,128], index: 10, kind: input, shape index: {}]
  %s11 = inlined_call_operand.hbm [shape: bf16[32,128], index: 11, kind: input, shape index: {}]
  %s12 = inlined_call_operand.hbm [shape: bf16[32,128], index: 12, kind: input, shape index: {}]
  %s13 = inlined_call_operand.hbm [shape: bf16[32,128], index: 13, kind: input, shape index: {}]
  %s14 = inlined_call_operand.vmem [shape: f32[1,128], index: 14, kind: input, shape index: {}]
  %s15 = inlined_call_operand.vmem [shape: bf16[64,32], index: 15, kind: output, shape index: {0}]
  %s16 = inlined_call_operand.vmem [shape: bf16[64,32], index: 16, kind: output, shape index: {1}]
  %17 = xla_tuple %s15, %s16
  %s18 = sld [smem:[#allocation0]]
  $region112: #{tpu_custom_call.1} parent=0
    _
  %s20 = ssub.s32 1, %s18
  %s21 = scalar_select 0, %s20, %s18
  $region1: #{tpu_custom_call.1} parent=0
    #allocation6 [shape = 'u8[4096]{0}', space=vmem, size = 0x1000, scoped, tag = 'input window, operand 1, single buffered']
    #allocation7 [shape = 's32[1]{0}', space=sflag, size = 0x4, scoped, tag = 'scoped memory for tpu_custom_call.1']
    #allocation8 [shape = 'u8[4096]{0}', space=vmem, size = 0x1000, scoped, tag = 'input window, operand 4, single buffered']
    #allocation9 [shape = 's32[1]{0}', space=sflag, size = 0x4, scoped, tag = 'scoped memory for tpu_custom_call.1']
    #allocation10 [shape = 'u8[8192]{0}', space=vmem, size = 0x2000, scoped, tag = 'input window, operand 11, single buffered']
    #allocation11 [shape = 'u8[8192]{0}', space=vmem, size = 0x2000, scoped, tag = 'input window, operand 12, single buffered']
    #allocation12 [shape = 's32[1]{0}', space=sflag, size = 0x4, scoped, tag = 'scoped memory for tpu_custom_call.1']
    #allocation13 [shape = 'u8[8192]{0}', space=vmem, size = 0x2000, scoped, tag = 'input window, operand 13, single buffered']
    %22 = vsyncpa [#allocation7], 0
    %23 = vsyncpa [#allocation9], 0
    %24 = vsyncpa [#allocation12], 0
    // Predicated region
    $region2: #{tpu_custom_call.1} parent=1 // pred_check
      _
    $region3: #{tpu_custom_call.1} parent=1 // pred_check_branch
      %26 = sbr.rel (0) target = $region5
    $region4: #{tpu_custom_call.1} parent=1 // pred_region
      _
    $region5: #{tpu_custom_call.1} parent=1 // pred_fallthru
      _
    // Predicated region
    $region6: #{tpu_custom_call.1} parent=1 // pred_check
      _
    $region7: #{tpu_custom_call.1} parent=1 // pred_check_branch
      %28 = sbr.rel (0) target = $region9
    $region8: #{tpu_custom_call.1} parent=1 // pred_region
      %30 = vsyncadd [#allocation7], 0
      %s31 = sshll.u32 %s1, 4
      %s32 = int_to_ptr.hbm [resolvable:$true] %s31
      %s33 = sshll.u32 [#allocation6], 4
      %s34 = int_to_ptr.vmem [resolvable:$true] %s33
      %39 = dma.hbm_to_vmem [thread:$0]  %s32, 128, %s34, [#allocation7], 64, 64, 4
    $region9: #{tpu_custom_call.1} parent=1 // pred_fallthru
      _
    // Predicated region
    $region10: #{tpu_custom_call.1} parent=1 // pred_check
      _
    $region11: #{tpu_custom_call.1} parent=1 // pred_check_branch
      %41 = sbr.rel (0) target = $region13
    $region12: #{tpu_custom_call.1} parent=1 // pred_region
      _
    $region13: #{tpu_custom_call.1} parent=1 // pred_fallthru
      _
    // Predicated region
    $region14: #{tpu_custom_call.1} parent=1 // pred_check
      _
    $region15: #{tpu_custom_call.1} parent=1 // pred_check_branch
      %43 = sbr.rel (0) target = $region17
    $region16: #{tpu_custom_call.1} parent=1 // pred_region
      _
    $region17: #{tpu_custom_call.1} parent=1 // pred_fallthru
      _
    // Predicated region
    $region18: #{tpu_custom_call.1} parent=1 // pred_check
      _
    $region19: #{tpu_custom_call.1} parent=1 // pred_check_branch
      %45 = sbr.rel (0) target = $region21
    $region20: #{tpu_custom_call.1} parent=1 // pred_region
      %47 = vsyncadd [#allocation9], 0
      %s48 = sshll.u32 %s4, 4
      %s49 = int_to_ptr.hbm [resolvable:$true] %s48
      %s50 = sshll.u32 [#allocation8], 4
      %s51 = int_to_ptr.vmem [resolvable:$true] %s50
      %56 = dma.hbm_to_vmem [thread:$0]  %s49, 128, %s51, [#allocation9], 64, 64, 4
    $region21: #{tpu_custom_call.1} parent=1 // pred_fallthru
      _
    // Predicated region
    $region22: #{tpu_custom_call.1} parent=1 // pred_check
      _
    $region23: #{tpu_custom_call.1} parent=1 // pred_check_branch
      %58 = sbr.rel (0) target = $region25
    $region24: #{tpu_custom_call.1} parent=1 // pred_region
      _
    $region25: #{tpu_custom_call.1} parent=1 // pred_fallthru
      _
    // Predicated region
    $region26: #{tpu_custom_call.1} parent=1 // pred_check
      _
    $region27: #{tpu_custom_call.1} parent=1 // pred_check_branch
      %60 = sbr.rel (0) target = $region29
    $region28: #{tpu_custom_call.1} parent=1 // pred_region
      _
    $region29: #{tpu_custom_call.1} parent=1 // pred_fallthru
      _
    // Predicated region
    $region30: #{tpu_custom_call.1} parent=1 // pred_check
      _
    $region31: #{tpu_custom_call.1} parent=1 // pred_check_branch
      %62 = sbr.rel (0) target = $region33
    $region32: #{tpu_custom_call.1} parent=1 // pred_region
      _
    $region33: #{tpu_custom_call.1} parent=1 // pred_fallthru
      _
    // Predicated region
    $region34: #{tpu_custom_call.1} parent=1 // pred_check
      _
    $region35: #{tpu_custom_call.1} parent=1 // pred_check_branch
      %64 = sbr.rel (0) target = $region37
    $region36: #{tpu_custom_call.1} parent=1 // pred_region
      _
    $region37: #{tpu_custom_call.1} parent=1 // pred_fallthru
      _
    // Predicated region
    $region38: #{tpu_custom_call.1} parent=1 // pred_check
      _
    $region39: #{tpu_custom_call.1} parent=1 // pred_check_branch
      %66 = sbr.rel (0) target = $region41
    $region40: #{tpu_custom_call.1} parent=1 // pred_region
      _
    $region41: #{tpu_custom_call.1} parent=1 // pred_fallthru
      _
    // Predicated region
    $region42: #{tpu_custom_call.1} parent=1 // pred_check
      _
    $region43: #{tpu_custom_call.1} parent=1 // pred_check_branch
      %68 = sbr.rel (0) target = $region45
    $region44: #{tpu_custom_call.1} parent=1 // pred_region
      _
    $region45: #{tpu_custom_call.1} parent=1 // pred_fallthru
      _
    // Predicated region
    $region46: #{tpu_custom_call.1} parent=1 // pred_check
      _
    $region47: #{tpu_custom_call.1} parent=1 // pred_check_branch
      %70 = sbr.rel (0) target = $region49
    $region48: #{tpu_custom_call.1} parent=1 // pred_region
      %72 = vsyncadd [#allocation9], 0
      %s73 = sshll.u32 %s11, 4
      %s74 = int_to_ptr.hbm [resolvable:$true] %s73
      %s75 = sshll.u32 [#allocation10], 4
      %s76 = int_to_ptr.vmem [resolvable:$true] %s75
      %81 = dma.hbm_to_vmem [thread:$0]  %s74, 256, %s76, [#allocation9], 64, 64, 4
    $region49: #{tpu_custom_call.1} parent=1 // pred_fallthru
      _
    // Predicated region
    $region50: #{tpu_custom_call.1} parent=1 // pred_check
      _
    $region51: #{tpu_custom_call.1} parent=1 // pred_check_branch
      %83 = sbr.rel (0) target = $region53
    $region52: #{tpu_custom_call.1} parent=1 // pred_region
      %85 = vsyncadd [#allocation12], 0
      %s86 = sshll.u32 %s12, 4
      %s87 = int_to_ptr.hbm [resolvable:$true] %s86
      %s88 = sshll.u32 [#allocation11], 4
      %s89 = int_to_ptr.vmem [resolvable:$true] %s88
      %94 = dma.hbm_to_vmem [thread:$0]  %s87, 256, %s89, [#allocation12], 64, 64, 4
    $region53: #{tpu_custom_call.1} parent=1 // pred_fallthru
      _
    // Predicated region
    $region54: #{tpu_custom_call.1} parent=1 // pred_check
      _
    $region55: #{tpu_custom_call.1} parent=1 // pred_check_branch
      %96 = sbr.rel (0) target = $region57
    $region56: #{tpu_custom_call.1} parent=1 // pred_region
      %98 = vsyncadd [#allocation12], 0
      %s99 = sshll.u32 %s13, 4
      %s100 = int_to_ptr.hbm [resolvable:$true] %s99
      %s101 = sshll.u32 [#allocation13], 4
      %s102 = int_to_ptr.vmem [resolvable:$true] %s101
      %107 = dma.hbm_to_vmem [thread:$0]  %s100, 256, %s102, [#allocation12], 64, 64, 4
    $region57: #{tpu_custom_call.1} parent=1 // pred_fallthru
      _
    // Predicated region
    $region58: #{tpu_custom_call.1} parent=1 // pred_check
      _
    $region59: #{tpu_custom_call.1} parent=1 // pred_check_branch
      %109 = sbr.rel (0) target = $region61
    $region60: #{tpu_custom_call.1} parent=1 // pred_region
      _
    $region61: #{tpu_custom_call.1} parent=1 // pred_fallthru
      _
    // Predicated region
    $region62: #{tpu_custom_call.1} parent=1 // pred_check
      _
    $region63: #{tpu_custom_call.1} parent=1 // pred_check_branch
      %111 = sbr.rel (0) target = $region65
    $region64: #{tpu_custom_call.1} parent=1 // pred_region
      %113 = dma.done [#allocation7], 128
    $region65: #{tpu_custom_call.1} parent=1 // pred_fallthru
      _
    // Predicated region
    $region66: #{tpu_custom_call.1} parent=1 // pred_check
      _
    $region67: #{tpu_custom_call.1} parent=1 // pred_check_branch
      %115 = sbr.rel (0) target = $region69
    $region68: #{tpu_custom_call.1} parent=1 // pred_region
      %117 = dma.done [#allocation9], 128
    $region69: #{tpu_custom_call.1} parent=1 // pred_fallthru
      _
    // Predicated region
    $region70: #{tpu_custom_call.1} parent=1 // pred_check
      _
    $region71: #{tpu_custom_call.1} parent=1 // pred_check_branch
      %119 = sbr.rel (0) target = $region73
    $region72: #{tpu_custom_call.1} parent=1 // pred_region
      %121 = dma.done [#allocation9], 256
    $region73: #{tpu_custom_call.1} parent=1 // pred_fallthru
      _
    // Predicated region
    $region74: #{tpu_custom_call.1} parent=1 // pred_check
      _
    $region75: #{tpu_custom_call.1} parent=1 // pred_check_branch
      %123 = sbr.rel (0) target = $region77
    $region76: #{tpu_custom_call.1} parent=1 // pred_region
      %125 = dma.done [#allocation12], 256
    $region77: #{tpu_custom_call.1} parent=1 // pred_fallthru
      _
    // Predicated region
    $region78: #{tpu_custom_call.1} parent=1 // pred_check
      _
    $region79: #{tpu_custom_call.1} parent=1 // pred_check_branch
      %127 = sbr.rel (0) target = $region81
    $region80: #{tpu_custom_call.1} parent=1 // pred_region
      %129 = dma.done [#allocation12], 256
    $region81: #{tpu_custom_call.1} parent=1 // pred_fallthru
      _
    %v131 = vld [vmem:[%s0] sm:$0xff]
    %v132 = vld [vmem:[%s0 + $0x8] sm:$0xff]
    %v133 = vld [vmem:[%s0 + $0x10] sm:$0xff]
    %v134 = vld [vmem:[%s0 + $0x18] sm:$0xff]
    %v135 = vld [vmem:[%s0 + $0x20] sm:$0xff]
    %v136 = vld [vmem:[%s0 + $0x28] sm:$0xff]
    %v137 = vld [vmem:[%s0 + $0x30] sm:$0xff]
    %v138 = vld [vmem:[%s0 + $0x38] sm:$0xff]
    %v139 = vmul.f32 %v131, %v131
    %v140 = vmul.f32 %v132, %v132
    %v141 = vmul.f32 %v133, %v133
    %v142 = vmul.f32 %v134, %v134
    %v143 = vmul.f32 %v135, %v135
    %v144 = vmul.f32 %v136, %v136
    %v145 = vmul.f32 %v137, %v137
    %v146 = vmul.f32 %v138, %v138
    %vm147 = vcmask 130048
    %v148 = vsel %vm147, %v139, 0.0
    %149 = vadd.xlane.f32.xlu0 %v148
    %v150 = vpop.xlane.xlu0 %149
    %v151 = vsel %vm147, %v140, 0.0
    %152 = vadd.xlane.f32.xlu0 %v151
    %v153 = vpop.xlane.xlu0 %152
    %v154 = vsel %vm147, %v141, 0.0
    %155 = vadd.xlane.f32.xlu0 %v154
    %v156 = vpop.xlane.xlu0 %155
    %v157 = vsel %vm147, %v142, 0.0
    %158 = vadd.xlane.f32.xlu0 %v157
    %v159 = vpop.xlane.xlu0 %158
    %v160 = vsel %vm147, %v143, 0.0
    %161 = vadd.xlane.f32.xlu0 %v160
    %v162 = vpop.xlane.xlu0 %161
    %v163 = vsel %vm147, %v144, 0.0
    %164 = vadd.xlane.f32.xlu0 %v163
    %v165 = vpop.xlane.xlu0 %164
    %v166 = vsel %vm147, %v145, 0.0
    %167 = vadd.xlane.f32.xlu0 %v166
    %v168 = vpop.xlane.xlu0 %167
    %v169 = vsel %vm147, %v146, 0.0
    %170 = vadd.xlane.f32.xlu0 %v169
    %v171 = vpop.xlane.xlu0 %170
    %v172 = vmax.f32 %v150, 1e-24
    %v173 = vmax.f32 %v153, 1e-24
    %v174 = vmax.f32 %v156, 1e-24
    %v175 = vmax.f32 %v159, 1e-24
    %v176 = vmax.f32 %v162, 1e-24
    %v177 = vmax.f32 %v165, 1e-24
    %v178 = vmax.f32 %v168, 1e-24
    %v179 = vmax.f32 %v171, 1e-24
    %v180 = vrsqrt.pop %v172
    %v181 = vmul.f32 %v180, %v172
    %v182 = vmul.f32 %v181, %v180
    %v183 = vmul.f32 0.5, %v182
    %v184 = vsub.f32 1.5, %v183
    %v185 = vmul.f32 %v180, %v184
    %vm186 = vweird.f32 %v172
    %vm187 = vweird.f32 %v180
    %vm188 = vmor %vm186, %vm187
    %v189 = vsel %vm188, %v180, %v185
    %v190 = vrsqrt.pop %v173
    %v191 = vmul.f32 %v190, %v173
    %v192 = vmul.f32 %v191, %v190
    %v193 = vmul.f32 0.5, %v192
    %v194 = vsub.f32 1.5, %v193
    %v195 = vmul.f32 %v190, %v194
    %vm196 = vweird.f32 %v173
    %vm197 = vweird.f32 %v190
    %vm198 = vmor %vm196, %vm197
    %v199 = vsel %vm198, %v190, %v195
    %v200 = vrsqrt.pop %v174
    %v201 = vmul.f32 %v200, %v174
    %v202 = vmul.f32 %v201, %v200
    %v203 = vmul.f32 0.5, %v202
    %v204 = vsub.f32 1.5, %v203
    %v205 = vmul.f32 %v200, %v204
    %vm206 = vweird.f32 %v174
    %vm207 = vweird.f32 %v200
    %vm208 = vmor %vm206, %vm207
    %v209 = vsel %vm208, %v200, %v205
    %v210 = vrsqrt.pop %v175
    %v211 = vmul.f32 %v210, %v175
    %v212 = vmul.f32 %v211, %v210
    %v213 = vmul.f32 0.5, %v212
    %v214 = vsub.f32 1.5, %v213
    %v215 = vmul.f32 %v210, %v214
    %vm216 = vweird.f32 %v175
    %vm217 = vweird.f32 %v210
    %vm218 = vmor %vm216, %vm217
    %v219 = vsel %vm218, %v210, %v215
    %v220 = vrsqrt.pop %v176
    %v221 = vmul.f32 %v220, %v176
    %v222 = vmul.f32 %v221, %v220
    %v223 = vmul.f32 0.5, %v222
    %v224 = vsub.f32 1.5, %v223
    %v225 = vmul.f32 %v220, %v224
    %vm226 = vweird.f32 %v176
    %vm227 = vweird.f32 %v220
    %vm228 = vmor %vm226, %vm227
    %v229 = vsel %vm228, %v220, %v225
    %v230 = vrsqrt.pop %v177
    %v231 = vmul.f32 %v230, %v177
    %v232 = vmul.f32 %v231, %v230
    %v233 = vmul.f32 0.5, %v232
    %v234 = vsub.f32 1.5, %v233
    %v235 = vmul.f32 %v230, %v234
    %vm236 = vweird.f32 %v177
    %vm237 = vweird.f32 %v230
    %vm238 = vmor %vm236, %vm237
    %v239 = vsel %vm238, %v230, %v235
    %v240 = vrsqrt.pop %v178
    %v241 = vmul.f32 %v240, %v178
    %v242 = vmul.f32 %v241, %v240
    %v243 = vmul.f32 0.5, %v242
    %v244 = vsub.f32 1.5, %v243
    %v245 = vmul.f32 %v240, %v244
    %vm246 = vweird.f32 %v178
    %vm247 = vweird.f32 %v240
    %vm248 = vmor %vm246, %vm247
    %v249 = vsel %vm248, %v240, %v245
    %v250 = vrsqrt.pop %v179
    %v251 = vmul.f32 %v250, %v179
    %v252 = vmul.f32 %v251, %v250
    %v253 = vmul.f32 0.5, %v252
    %v254 = vsub.f32 1.5, %v253
    %v255 = vmul.f32 %v250, %v254
    %vm256 = vweird.f32 %v179
    %vm257 = vweird.f32 %v250
    %vm258 = vmor %vm256, %vm257
    %v259 = vsel %vm258, %v250, %v255
    %v260 = vmul.f32 %v131, %v189
    %v261 = vmul.f32 %v132, %v199
    %v262 = vmul.f32 %v133, %v209
    %v263 = vmul.f32 %v134, %v219
    %v264 = vmul.f32 %v135, %v229
    %v265 = vmul.f32 %v136, %v239
    %v266 = vmul.f32 %v137, %v249
    %v267 = vmul.f32 %v138, %v259
    %v268 = vpack.c.bf16 %v261, %v260
    %v269 = vpack.c.bf16 %v263, %v262
    %v270 = vpack.c.bf16 %v265, %v264
    %v271 = vpack.c.bf16 %v267, %v266
    %v272 = vld [vmem:[#allocation6] sm:$0xf]
    %v273 = vld [vmem:[#allocation6 + $0x4] sm:$0xf]
    %v274 = vld [vmem:[%s3] sm:$0x1]
    %v276 = vperm.slane %v274, 0
    %v280 = vunpack.c.l.b16 %v272
    %v281 = vunpack.c.l.b16 %v273
    %v282 = vpack.c.b16 %v281, %v280
    %v285 = vsel %vm147, %v268, 0
    %v288 = vsel %vm147, %v269, 0
    %v291 = vsel %vm147, %v270, 0
    %v294 = vsel %vm147, %v271, 0
    %296 = vmatpush.bf16.msra.mxu0 0
    %297 = vmatpush.bf16.msra.mxu0 0
    %298 = vmatpush.bf16.msra.mxu0 0
    %299 = vmatpush.bf16.msra.mxu0 0
    %300 = vmatpush.bf16.msra.mxu0 0
    %301 = vmatpush.bf16.msra.mxu0 0
    %302 = vmatpush.bf16.msra.mxu0 0
    %303 = vmatpush.bf16.msra.mxu0 %v282
    %304 = vmatmul.bf16.gmra.mxu0 %v285
    %v305 = vpop.f32.mrf.mxu0
    %v306 = vadd.f32 %v276, %v305
    %v307 = vpop.f32.mrf.mxu0
    %v308 = vadd.f32 %v276, %v307
    %309 = vmatmul.bf16.gmra.mxu0 %v288
    %v310 = vpop.f32.mrf.mxu0
    %v311 = vadd.f32 %v276, %v310
    %v312 = vpop.f32.mrf.mxu0
    %v313 = vadd.f32 %v276, %v312
    %314 = vmatmul.bf16.gmra.mxu0 %v291
    %v315 = vpop.f32.mrf.mxu0
    %v316 = vadd.f32 %v276, %v315
    %v317 = vpop.f32.mrf.mxu0
    %v318 = vadd.f32 %v276, %v317
    %319 = vmatmul.bf16.gmra.mxu0 %v294
    %v320 = vpop.f32.mrf.mxu0
    %v321 = vadd.f32 %v276, %v320
    %v322 = vpop.f32.mrf.mxu0
    %v323 = vadd.f32 %v276, %v322
    %324 = vdwg.mxu0
    %325 = vst [vmem:[#allocation2] sm:$0xff] %v306
    %326 = vst [vmem:[#allocation2 + $0x8] sm:$0xff] %v308
    %327 = vst [vmem:[#allocation2 + $0x10] sm:$0xff] %v311
    %328 = vst [vmem:[#allocation2 + $0x18] sm:$0xff] %v313
    %329 = vst [vmem:[#allocation2 + $0x20] sm:$0xff] %v316
    %330 = vst [vmem:[#allocation2 + $0x28] sm:$0xff] %v318
    %331 = vst [vmem:[#allocation2 + $0x30] sm:$0xff] %v321
    %332 = vst [vmem:[#allocation2 + $0x38] sm:$0xff] %v323
    %v333 = vld [vmem:[#allocation8] sm:$0xf]
    %v334 = vld [vmem:[#allocation8 + $0x4] sm:$0xf]
    %v335 = vld [vmem:[%s6] sm:$0x1]
    %v337 = vperm.slane %v335, 0
    %v341 = vunpack.c.l.b16 %v333
    %v342 = vunpack.c.l.b16 %v334
    %v343 = vpack.c.b16 %v342, %v341
    %345 = vmatpush.bf16.msra.mxu0 0
    %346 = vmatpush.bf16.msra.mxu0 0
    %347 = vmatpush.bf16.msra.mxu0 0
    %348 = vmatpush.bf16.msra.mxu0 0
    %349 = vmatpush.bf16.msra.mxu0 0
    %350 = vmatpush.bf16.msra.mxu0 0
    %351 = vmatpush.bf16.msra.mxu0 0
    %352 = vmatpush.bf16.msra.mxu0 %v343
    %353 = vmatmul.bf16.gmra.mxu0 %v285
    %v354 = vpop.f32.mrf.mxu0
    %v355 = vadd.f32 %v337, %v354
    %v356 = vpop.f32.mrf.mxu0
    %v357 = vadd.f32 %v337, %v356
    %358 = vmatmul.bf16.gmra.mxu0 %v288
    %v359 = vpop.f32.mrf.mxu0
    %v360 = vadd.f32 %v337, %v359
    %v361 = vpop.f32.mrf.mxu0
    %v362 = vadd.f32 %v337, %v361
    %363 = vmatmul.bf16.gmra.mxu0 %v291
    %v364 = vpop.f32.mrf.mxu0
    %v365 = vadd.f32 %v337, %v364
    %v366 = vpop.f32.mrf.mxu0
    %v367 = vadd.f32 %v337, %v366
    %368 = vmatmul.bf16.gmra.mxu0 %v294
    %v369 = vpop.f32.mrf.mxu0
    %v370 = vadd.f32 %v337, %v369
    %v371 = vpop.f32.mrf.mxu0
    %v372 = vadd.f32 %v337, %v371
    %373 = vdwg.mxu0
    %374 = vst [vmem:[#allocation3] sm:$0xff] %v355
    %375 = vst [vmem:[#allocation3 + $0x8] sm:$0xff] %v357
    %376 = vst [vmem:[#allocation3 + $0x10] sm:$0xff] %v360
    %377 = vst [vmem:[#allocation3 + $0x18] sm:$0xff] %v362
    %378 = vst [vmem:[#allocation3 + $0x20] sm:$0xff] %v365
    %379 = vst [vmem:[#allocation3 + $0x28] sm:$0xff] %v367
    %380 = vst [vmem:[#allocation3 + $0x30] sm:$0xff] %v370
    %381 = vst [vmem:[#allocation3 + $0x38] sm:$0xff] %v372
    %v382 = vld [vmem:[%s2] sm:$0xf]
    %v383 = vld [vmem:[%s2 + $0x4] sm:$0xf]
    %v384 = vld [vmem:[%s2 + $0x8] sm:$0xf]
    %v385 = vld [vmem:[%s2 + $0xc] sm:$0xf]
    %v386 = vld [vmem:[%s5] sm:$0xf]
    %v387 = vld [vmem:[%s5 + $0x4] sm:$0xf]
    %v388 = vld [vmem:[%s5 + $0x8] sm:$0xf]
    %v389 = vld [vmem:[%s5 + $0xc] sm:$0xf]
    loop: start=0, step=1, limit=8
    $region82: #{tpu_custom_call.1} parent=1 // loop_pre_header
      _
    $region83: #{tpu_custom_call.1} parent=1 // loop_header
      %s391 = sphi 0, %s395
      %p392 = scmp.ge.s32.totalorder %s391, 8
      %v396 = vphi 0.0, %v510
      %v397 = vphi 0.0, %v504
      %v398 = vphi 0.0, %v547
      %v399 = vphi 0.0, %v541
    $region84: #{tpu_custom_call.1} parent=1 // loop_header_branch
      %394 = sbr.rel (%p392) target = $region88
    $region85: #{tpu_custom_call.1} parent=1 // loop_body
      %s400 = smul.u32 %s391, 8
      %s401 = ssub.s32 7, %s391
      %s402 = smul.u32 %s401, 8
      %s403 = scalar_lea.vmem [#allocation2], %s400
      %v404 = vld [vmem:[%s403] sm:$0xff]
      %v405 = vpack.c.bf16 %v396, %v396
      %407 = vrot.lane.b32.xlu0 %v405, 32
      %v408 = vpop.permute.xlu0 %407
      %v413 = vunpack.c.l.b16 %v382
      %v414 = vunpack.c.l.b16 %v383
      %v415 = vunpack.c.l.b16 %v384
      %v416 = vunpack.c.l.b16 %v385
      %v417 = vpack.c.b16 %v414, %v413
      %v418 = vpack.c.b16 %v416, %v415
      %vm421 = vcmask 261120
      %v423 = vsel %vm421, %v408, 0
      %425 = vmatpush.bf16.msra.mxu0 0
      %426 = vmatpush.bf16.msra.mxu0 0
      %427 = vmatpush.bf16.msra.mxu0 0
      %428 = vmatpush.bf16.msra.mxu0 0
      %429 = vmatpush.bf16.msra.mxu0 0
      %430 = vmatpush.bf16.msra.mxu0 0
      %431 = vmatpush.bf16.msra.mxu0 %v418
      %432 = vmatpush.bf16.msra.mxu0 %v417
      %433 = vmatmul.bf16.gmra.mxu0 %v423
      %v434 = vpop.f32.mrf.mxu0
      %v435 = vadd.f32 0.0, %v434
      %v436 = vpop.f32.mrf.mxu0
      %437 = vdwg.mxu0
      %v438 = vadd.f32 %v404, %v435
      %s439 = scalar_lea.vmem [#allocation3], %s402
      %v440 = vld [vmem:[%s439] sm:$0xff]
      %v441 = vpack.c.bf16 %v398, %v398
      %443 = vrot.lane.b32.xlu0 %v441, 32
      %v444 = vpop.permute.xlu0 %443
      %v449 = vunpack.c.l.b16 %v386
      %v450 = vunpack.c.l.b16 %v387
      %v451 = vunpack.c.l.b16 %v388
      %v452 = vunpack.c.l.b16 %v389
      %v453 = vpack.c.b16 %v450, %v449
      %v454 = vpack.c.b16 %v452, %v451
      %v458 = vsel %vm421, %v444, 0
      %460 = vmatpush.bf16.msra.mxu0 0
      %461 = vmatpush.bf16.msra.mxu0 0
      %462 = vmatpush.bf16.msra.mxu0 0
      %463 = vmatpush.bf16.msra.mxu0 0
      %464 = vmatpush.bf16.msra.mxu0 0
      %465 = vmatpush.bf16.msra.mxu0 0
      %466 = vmatpush.bf16.msra.mxu0 %v454
      %467 = vmatpush.bf16.msra.mxu0 %v453
      %468 = vmatmul.bf16.gmra.mxu0 %v458
      %v469 = vpop.f32.mrf.mxu0
      %v470 = vadd.f32 0.0, %v469
      %v471 = vpop.f32.mrf.mxu0
      %472 = vdwg.mxu0
      %v473 = vadd.f32 %v440, %v470
      %v474 = vxor.u32 %v438, 2147483648
      %v475 = vmul.f32 %v474, 1.442695
      %v476 = vpow.pop %v475
      %v477 = vadd.f32 %v476, 1.0
      %v478 = vrcp.pop %v477
      %v479 = vmul.f32 %v477, %v478
      %v480 = vsub.f32 1.0, %v479
      %v481 = vmul.f32 %v478, %v480
      %v482 = vadd.f32 %v478, %v481
      %vm483 = vweird.f32 %v477
      %vm484 = vweird.f32 %v478
      %vm485 = vmor %vm483, %vm484
      %v486 = vsel %vm485, %v478, %v482
      %v487 = vand.u32 2147483647, %v477
      %vm488 = vcmp.eq.f32.partialorder %v487, 8.507059e+37
      %v489 = vand.u32 %v477, 2147483648
      %v490 = vor.u32 1.1754944e-38, %v489
      %v491 = vsel %vm488, %v490, %v486
      %v492 = vmul.f32 1.0, %v491
      %v493 = vtanh.pop %v438
      %v494 = vmul.f32 %v492, %v397
      %496 = vrot.lane.b32.xlu0 %v493, 64
      %v497 = vpop.permute.xlu0 %496
      %v499 = vmul.f32 %v492, %v497
      %501 = vrot.lane.b32.xlu0 %v499, 32
      %v502 = vpop.permute.xlu0 %501
      %v504 = vadd.f32 %v494, %v502
      %v505 = vtanh.pop %v504
      %507 = vrot.lane.b32.xlu0 %v505, 64
      %v508 = vpop.permute.xlu0 %507
      %v510 = vmul.f32 %v492, %v508
      %v511 = vxor.u32 %v473, 2147483648
      %v512 = vmul.f32 %v511, 1.442695
      %v513 = vpow.pop %v512
      %v514 = vadd.f32 %v513, 1.0
      %v515 = vrcp.pop %v514
      %v516 = vmul.f32 %v514, %v515
      %v517 = vsub.f32 1.0, %v516
      %v518 = vmul.f32 %v515, %v517
      %v519 = vadd.f32 %v515, %v518
      %vm520 = vweird.f32 %v514
      %vm521 = vweird.f32 %v515
      %vm522 = vmor %vm520, %vm521
      %v523 = vsel %vm522, %v515, %v519
      %v524 = vand.u32 2147483647, %v514
      %vm525 = vcmp.eq.f32.partialorder %v524, 8.507059e+37
      %v526 = vand.u32 %v514, 2147483648
      %v527 = vor.u32 1.1754944e-38, %v526
      %v528 = vsel %vm525, %v527, %v523
      %v529 = vmul.f32 1.0, %v528
      %v530 = vtanh.pop %v473
      %v531 = vmul.f32 %v529, %v399
      %533 = vrot.lane.b32.xlu0 %v530, 64
      %v534 = vpop.permute.xlu0 %533
      %v536 = vmul.f32 %v529, %v534
      %538 = vrot.lane.b32.xlu0 %v536, 32
      %v539 = vpop.permute.xlu0 %538
      %v541 = vadd.f32 %v531, %v539
      %v542 = vtanh.pop %v541
      %544 = vrot.lane.b32.xlu0 %v542, 64
      %v545 = vpop.permute.xlu0 %544
      %v547 = vmul.f32 %v529, %v545
      %549 = vrot.lane.b32.xlu0 %v510, 32
      %v550 = vpop.permute.xlu0 %549
      %s552 = scalar_lea.vmem [#allocation4], %s400
      %553 = vst.msk [vmem:[%s552] sm:$0xff] %vm421, %v550
      %555 = vrot.lane.b32.xlu0 %v547, 32
      %v556 = vpop.permute.xlu0 %555
      %s558 = scalar_lea.vmem [#allocation5], %s402
      %559 = vst.msk [vmem:[%s558] sm:$0xff] %vm421, %v556
    $region86: #{tpu_custom_call.1} parent=1 // loop_footer
      %s395 = sadd.s32 1, %s391
    $region87: #{tpu_custom_call.1} parent=1 // loop_footer_branch
      %390 = sbr.rel target = $region83
    $region88: #{tpu_custom_call.1} parent=1 // loop_exit
      _
    %v560 = vld [vmem:[#allocation4] sm:$0xff]
    %v561 = vld [vmem:[#allocation4 + $0x8] sm:$0xff]
    %v562 = vld [vmem:[#allocation4 + $0x10] sm:$0xff]
    %v563 = vld [vmem:[#allocation4 + $0x18] sm:$0xff]
    %v564 = vld [vmem:[#allocation4 + $0x20] sm:$0xff]
    %v565 = vld [vmem:[#allocation4 + $0x28] sm:$0xff]
    %v566 = vld [vmem:[#allocation4 + $0x30] sm:$0xff]
    %v567 = vld [vmem:[#allocation4 + $0x38] sm:$0xff]
    %v568 = vpack.c.bf16 %v561, %v560
    %v569 = vpack.c.bf16 %v563, %v562
    %v570 = vpack.c.bf16 %v565, %v564
    %v571 = vpack.c.bf16 %v567, %v566
    %v572 = vld [vmem:[#allocation5] sm:$0xff]
    %v573 = vld [vmem:[#allocation5 + $0x8] sm:$0xff]
    %v574 = vld [vmem:[#allocation5 + $0x10] sm:$0xff]
    %v575 = vld [vmem:[#allocation5 + $0x18] sm:$0xff]
    %v576 = vld [vmem:[#allocation5 + $0x20] sm:$0xff]
    %v577 = vld [vmem:[#allocation5 + $0x28] sm:$0xff]
    %v578 = vld [vmem:[#allocation5 + $0x30] sm:$0xff]
    %v579 = vld [vmem:[#allocation5 + $0x38] sm:$0xff]
    %v580 = vpack.c.bf16 %v573, %v572
    %v581 = vpack.c.bf16 %v575, %v574
    %v582 = vpack.c.bf16 %v577, %v576
    %v583 = vpack.c.bf16 %v579, %v578
    %v584 = vld [vmem:[%s7] sm:$0xf]
    %v585 = vld [vmem:[%s7 + $0x4] sm:$0xf]
    %v586 = vld [vmem:[%s7 + $0x8] sm:$0xf]
    %v587 = vld [vmem:[%s7 + $0xc] sm:$0xf]
    %v588 = vld [vmem:[%s8] sm:$0xf]
    %v589 = vld [vmem:[%s8 + $0x4] sm:$0xf]
    %v590 = vld [vmem:[%s8 + $0x8] sm:$0xf]
    %v591 = vld [vmem:[%s8 + $0xc] sm:$0xf]
    %v596 = vunpack.c.l.b16 %v588
    %v597 = vunpack.c.l.b16 %v589
    %v598 = vunpack.c.l.b16 %v590
    %v599 = vunpack.c.l.b16 %v591
    %v600 = vpack.c.b16 %v597, %v596
    %v601 = vpack.c.b16 %v599, %v598
    %vm604 = vcmask 261120
    %v606 = vsel %vm604, %v580, 0
    %v609 = vsel %vm604, %v581, 0
    %v612 = vsel %vm604, %v582, 0
    %v615 = vsel %vm604, %v583, 0
    %617 = vmatpush.bf16.msra.mxu0 0
    %618 = vmatpush.bf16.msra.mxu0 0
    %619 = vmatpush.bf16.msra.mxu0 0
    %620 = vmatpush.bf16.msra.mxu0 0
    %621 = vmatpush.bf16.msra.mxu0 0
    %622 = vmatpush.bf16.msra.mxu0 0
    %623 = vmatpush.bf16.msra.mxu0 %v601
    %624 = vmatpush.bf16.msra.mxu0 %v600
    %625 = vmatmul.bf16.gmra.mxu0 %v606
    %v626 = vpop.f32.mrf.mxu0
    %v627 = vadd.f32 0.0, %v626
    %v628 = vpop.f32.mrf.mxu0
    %v629 = vadd.f32 0.0, %v628
    %630 = vmatmul.bf16.gmra.mxu0 %v609
    %v631 = vpop.f32.mrf.mxu0
    %v632 = vadd.f32 0.0, %v631
    %v633 = vpop.f32.mrf.mxu0
    %v634 = vadd.f32 0.0, %v633
    %635 = vmatmul.bf16.gmra.mxu0 %v612
    %v636 = vpop.f32.mrf.mxu0
    %v637 = vadd.f32 0.0, %v636
    %v638 = vpop.f32.mrf.mxu0
    %v639 = vadd.f32 0.0, %v638
    %640 = vmatmul.bf16.gmra.mxu0 %v615
    %v641 = vpop.f32.mrf.mxu0
    %v642 = vadd.f32 0.0, %v641
    %v643 = vpop.f32.mrf.mxu0
    %v644 = vadd.f32 0.0, %v643
    %645 = vdwg.mxu0
    %v650 = vunpack.c.l.b16 %v584
    %v651 = vunpack.c.l.b16 %v585
    %v652 = vunpack.c.l.b16 %v586
    %v653 = vunpack.c.l.b16 %v587
    %v654 = vpack.c.b16 %v651, %v650
    %v655 = vpack.c.b16 %v653, %v652
    %v659 = vsel %vm604, %v568, 0
    %v662 = vsel %vm604, %v569, 0
    %v665 = vsel %vm604, %v570, 0
    %v668 = vsel %vm604, %v571, 0
    %670 = vmatpush.bf16.msra.mxu0 0
    %671 = vmatpush.bf16.msra.mxu0 0
    %672 = vmatpush.bf16.msra.mxu0 0
    %673 = vmatpush.bf16.msra.mxu0 0
    %674 = vmatpush.bf16.msra.mxu0 0
    %675 = vmatpush.bf16.msra.mxu0 0
    %676 = vmatpush.bf16.msra.mxu0 %v655
    %677 = vmatpush.bf16.msra.mxu0 %v654
    %678 = vmatmul.bf16.gmra.mxu0 %v659
    %v679 = vpop.f32.mrf.mxu0
    %v680 = vadd.f32 %v627, %v679
    %v681 = vpop.f32.mrf.mxu0
    %v682 = vadd.f32 %v629, %v681
    %683 = vmatmul.bf16.gmra.mxu0 %v662
    %v684 = vpop.f32.mrf.mxu0
    %v685 = vadd.f32 %v632, %v684
    %v686 = vpop.f32.mrf.mxu0
    %v687 = vadd.f32 %v634, %v686
    %688 = vmatmul.bf16.gmra.mxu0 %v665
    %v689 = vpop.f32.mrf.mxu0
    %v690 = vadd.f32 %v637, %v689
    %v691 = vpop.f32.mrf.mxu0
    %v692 = vadd.f32 %v639, %v691
    %693 = vmatmul.bf16.gmra.mxu0 %v668
    %v694 = vpop.f32.mrf.mxu0
    %v695 = vadd.f32 %v642, %v694
    %v696 = vpop.f32.mrf.mxu0
    %v697 = vadd.f32 %v644, %v696
    %698 = vdwg.mxu0
    %v699 = vld [vmem:[%s10] sm:$0x1]
    %v701 = vperm.slane %v699, 0
    %v703 = vadd.f32 %v680, %v701
    %v704 = vadd.f32 %v682, %v701
    %v705 = vadd.f32 %v685, %v701
    %v706 = vadd.f32 %v687, %v701
    %v707 = vadd.f32 %v690, %v701
    %v708 = vadd.f32 %v692, %v701
    %v709 = vadd.f32 %v695, %v701
    %v710 = vadd.f32 %v697, %v701
    %711 = vst [vmem:[#allocation2] sm:$0xff] %v703
    %712 = vst [vmem:[#allocation2 + $0x8] sm:$0xff] %v704
    %713 = vst [vmem:[#allocation2 + $0x10] sm:$0xff] %v705
    %714 = vst [vmem:[#allocation2 + $0x18] sm:$0xff] %v706
    %715 = vst [vmem:[#allocation2 + $0x20] sm:$0xff] %v707
    %716 = vst [vmem:[#allocation2 + $0x28] sm:$0xff] %v708
    %717 = vst [vmem:[#allocation2 + $0x30] sm:$0xff] %v709
    %718 = vst [vmem:[#allocation2 + $0x38] sm:$0xff] %v710
    %v719 = vld [vmem:[#allocation10] sm:$0xf]
    %v720 = vld [vmem:[#allocation10 + $0x4] sm:$0xf]
    %v721 = vld [vmem:[#allocation10 + $0x8] sm:$0xf]
    %v722 = vld [vmem:[#allocation10 + $0xc] sm:$0xf]
    %v723 = vld [vmem:[#allocation11] sm:$0xf]
    %v724 = vld [vmem:[#allocation11 + $0x4] sm:$0xf]
    %v725 = vld [vmem:[#allocation11 + $0x8] sm:$0xf]
    %v726 = vld [vmem:[#allocation11 + $0xc] sm:$0xf]
    %v731 = vunpack.c.l.b16 %v723
    %v732 = vunpack.c.l.b16 %v724
    %v733 = vunpack.c.l.b16 %v725
    %v734 = vunpack.c.l.b16 %v726
    %v735 = vpack.c.b16 %v732, %v731
    %v736 = vpack.c.b16 %v734, %v733
    %739 = vmatpush.bf16.msra.mxu0 0
    %740 = vmatpush.bf16.msra.mxu0 0
    %741 = vmatpush.bf16.msra.mxu0 0
    %742 = vmatpush.bf16.msra.mxu0 0
    %743 = vmatpush.bf16.msra.mxu0 0
    %744 = vmatpush.bf16.msra.mxu0 0
    %745 = vmatpush.bf16.msra.mxu0 %v736
    %746 = vmatpush.bf16.msra.mxu0 %v735
    %747 = vmatmul.bf16.gmra.mxu0 %v606
    %v748 = vpop.f32.mrf.mxu0
    %v749 = vadd.f32 0.0, %v748
    %v750 = vpop.f32.mrf.mxu0
    %v751 = vadd.f32 0.0, %v750
    %752 = vmatmul.bf16.gmra.mxu0 %v609
    %v753 = vpop.f32.mrf.mxu0
    %v754 = vadd.f32 0.0, %v753
    %v755 = vpop.f32.mrf.mxu0
    %v756 = vadd.f32 0.0, %v755
    %757 = vmatmul.bf16.gmra.mxu0 %v612
    %v758 = vpop.f32.mrf.mxu0
    %v759 = vadd.f32 0.0, %v758
    %v760 = vpop.f32.mrf.mxu0
    %v761 = vadd.f32 0.0, %v760
    %762 = vmatmul.bf16.gmra.mxu0 %v615
    %v763 = vpop.f32.mrf.mxu0
    %v764 = vadd.f32 0.0, %v763
    %v765 = vpop.f32.mrf.mxu0
    %v766 = vadd.f32 0.0, %v765
    %767 = vdwg.mxu0
    %v772 = vunpack.c.l.b16 %v719
    %v773 = vunpack.c.l.b16 %v720
    %v774 = vunpack.c.l.b16 %v721
    %v775 = vunpack.c.l.b16 %v722
    %v776 = vpack.c.b16 %v773, %v772
    %v777 = vpack.c.b16 %v775, %v774
    %780 = vmatpush.bf16.msra.mxu0 0
    %781 = vmatpush.bf16.msra.mxu0 0
    %782 = vmatpush.bf16.msra.mxu0 0
    %783 = vmatpush.bf16.msra.mxu0 0
    %784 = vmatpush.bf16.msra.mxu0 0
    %785 = vmatpush.bf16.msra.mxu0 0
    %786 = vmatpush.bf16.msra.mxu0 %v777
    %787 = vmatpush.bf16.msra.mxu0 %v776
    %788 = vmatmul.bf16.gmra.mxu0 %v659
    %v789 = vpop.f32.mrf.mxu0
    %v790 = vadd.f32 %v749, %v789
    %v791 = vpop.f32.mrf.mxu0
    %v792 = vadd.f32 %v751, %v791
    %793 = vmatmul.bf16.gmra.mxu0 %v662
    %v794 = vpop.f32.mrf.mxu0
    %v795 = vadd.f32 %v754, %v794
    %v796 = vpop.f32.mrf.mxu0
    %v797 = vadd.f32 %v756, %v796
    %798 = vmatmul.bf16.gmra.mxu0 %v665
    %v799 = vpop.f32.mrf.mxu0
    %v800 = vadd.f32 %v759, %v799
    %v801 = vpop.f32.mrf.mxu0
    %v802 = vadd.f32 %v761, %v801
    %803 = vmatmul.bf16.gmra.mxu0 %v668
    %v804 = vpop.f32.mrf.mxu0
    %v805 = vadd.f32 %v764, %v804
    %v806 = vpop.f32.mrf.mxu0
    %v807 = vadd.f32 %v766, %v806
    %808 = vdwg.mxu0
    %v809 = vld [vmem:[%s14] sm:$0x1]
    %v811 = vperm.slane %v809, 0
    %v813 = vadd.f32 %v790, %v811
    %v814 = vadd.f32 %v792, %v811
    %v815 = vadd.f32 %v795, %v811
    %v816 = vadd.f32 %v797, %v811
    %v817 = vadd.f32 %v800, %v811
    %v818 = vadd.f32 %v802, %v811
    %v819 = vadd.f32 %v805, %v811
    %v820 = vadd.f32 %v807, %v811
    %821 = vst [vmem:[#allocation3] sm:$0xff] %v813
    %822 = vst [vmem:[#allocation3 + $0x8] sm:$0xff] %v814
    %823 = vst [vmem:[#allocation3 + $0x10] sm:$0xff] %v815
    %824 = vst [vmem:[#allocation3 + $0x18] sm:$0xff] %v816
    %825 = vst [vmem:[#allocation3 + $0x20] sm:$0xff] %v817
    %826 = vst [vmem:[#allocation3 + $0x28] sm:$0xff] %v818
    %827 = vst [vmem:[#allocation3 + $0x30] sm:$0xff] %v819
    %828 = vst [vmem:[#allocation3 + $0x38] sm:$0xff] %v820
    %v829 = vld [vmem:[%s9] sm:$0xf]
    %v830 = vld [vmem:[%s9 + $0x4] sm:$0xf]
    %v831 = vld [vmem:[%s9 + $0x8] sm:$0xf]
    %v832 = vld [vmem:[%s9 + $0xc] sm:$0xf]
    %v833 = vld [vmem:[#allocation13] sm:$0xf]
    %v834 = vld [vmem:[#allocation13 + $0x4] sm:$0xf]
    %v835 = vld [vmem:[#allocation13 + $0x8] sm:$0xf]
    %v836 = vld [vmem:[#allocation13 + $0xc] sm:$0xf]
    loop: start=0, step=1, limit=8
    $region89: #{tpu_custom_call.1} parent=1 // loop_pre_header
      _
    $region90: #{tpu_custom_call.1} parent=1 // loop_header
      %s838 = sphi 0, %s842
      %p839 = scmp.ge.s32.totalorder %s838, 8
      %v843 = vphi 0.0, %v956
      %v844 = vphi 0.0, %v950
      %v845 = vphi 0.0, %v993
      %v846 = vphi 0.0, %v987
    $region91: #{tpu_custom_call.1} parent=1 // loop_header_branch
      %841 = sbr.rel (%p839) target = $region95
    $region92: #{tpu_custom_call.1} parent=1 // loop_body
      %s847 = smul.u32 %s838, 8
      %s848 = ssub.s32 7, %s838
      %s849 = smul.u32 %s848, 8
      %s850 = scalar_lea.vmem [#allocation2], %s847
      %v851 = vld [vmem:[%s850] sm:$0xff]
      %v852 = vpack.c.bf16 %v843, %v843
      %854 = vrot.lane.b32.xlu0 %v852, 32
      %v855 = vpop.permute.xlu0 %854
      %v860 = vunpack.c.l.b16 %v829
      %v861 = vunpack.c.l.b16 %v830
      %v862 = vunpack.c.l.b16 %v831
      %v863 = vunpack.c.l.b16 %v832
      %v864 = vpack.c.b16 %v861, %v860
      %v865 = vpack.c.b16 %v863, %v862
      %v869 = vsel %vm604, %v855, 0
      %871 = vmatpush.bf16.msra.mxu0 0
      %872 = vmatpush.bf16.msra.mxu0 0
      %873 = vmatpush.bf16.msra.mxu0 0
      %874 = vmatpush.bf16.msra.mxu0 0
      %875 = vmatpush.bf16.msra.mxu0 0
      %876 = vmatpush.bf16.msra.mxu0 0
      %877 = vmatpush.bf16.msra.mxu0 %v865
      %878 = vmatpush.bf16.msra.mxu0 %v864
      %879 = vmatmul.bf16.gmra.mxu0 %v869
      %v880 = vpop.f32.mrf.mxu0
      %v881 = vadd.f32 0.0, %v880
      %v882 = vpop.f32.mrf.mxu0
      %883 = vdwg.mxu0
      %v884 = vadd.f32 %v851, %v881
      %s885 = scalar_lea.vmem [#allocation3], %s849
      %v886 = vld [vmem:[%s885] sm:$0xff]
      %v887 = vpack.c.bf16 %v845, %v845
      %889 = vrot.lane.b32.xlu0 %v887, 32
      %v890 = vpop.permute.xlu0 %889
      %v895 = vunpack.c.l.b16 %v833
      %v896 = vunpack.c.l.b16 %v834
      %v897 = vunpack.c.l.b16 %v835
      %v898 = vunpack.c.l.b16 %v836
      %v899 = vpack.c.b16 %v896, %v895
      %v900 = vpack.c.b16 %v898, %v897
      %v904 = vsel %vm604, %v890, 0
      %906 = vmatpush.bf16.msra.mxu0 0
      %907 = vmatpush.bf16.msra.mxu0 0
      %908 = vmatpush.bf16.msra.mxu0 0
      %909 = vmatpush.bf16.msra.mxu0 0
      %910 = vmatpush.bf16.msra.mxu0 0
      %911 = vmatpush.bf16.msra.mxu0 0
      %912 = vmatpush.bf16.msra.mxu0 %v900
      %913 = vmatpush.bf16.msra.mxu0 %v899
      %914 = vmatmul.bf16.gmra.mxu0 %v904
      %v915 = vpop.f32.mrf.mxu0
      %v916 = vadd.f32 0.0, %v915
      %v917 = vpop.f32.mrf.mxu0
      %918 = vdwg.mxu0
      %v919 = vadd.f32 %v886, %v916
      %v920 = vxor.u32 %v884, 2147483648
      %v921 = vmul.f32 %v920, 1.442695
      %v922 = vpow.pop %v921
      %v923 = vadd.f32 %v922, 1.0
      %v924 = vrcp.pop %v923
      %v925 = vmul.f32 %v923, %v924
      %v926 = vsub.f32 1.0, %v925
      %v927 = vmul.f32 %v924, %v926
      %v928 = vadd.f32 %v924, %v927
      %vm929 = vweird.f32 %v923
      %vm930 = vweird.f32 %v924
      %vm931 = vmor %vm929, %vm930
      %v932 = vsel %vm931, %v924, %v928
      %v933 = vand.u32 2147483647, %v923
      %vm934 = vcmp.eq.f32.partialorder %v933, 8.507059e+37
      %v935 = vand.u32 %v923, 2147483648
      %v936 = vor.u32 1.1754944e-38, %v935
      %v937 = vsel %vm934, %v936, %v932
      %v938 = vmul.f32 1.0, %v937
      %v939 = vtanh.pop %v884
      %v940 = vmul.f32 %v938, %v844
      %942 = vrot.lane.b32.xlu0 %v939, 64
      %v943 = vpop.permute.xlu0 %942
      %v945 = vmul.f32 %v938, %v943
      %947 = vrot.lane.b32.xlu0 %v945, 32
      %v948 = vpop.permute.xlu0 %947
      %v950 = vadd.f32 %v940, %v948
      %v951 = vtanh.pop %v950
      %953 = vrot.lane.b32.xlu0 %v951, 64
      %v954 = vpop.permute.xlu0 %953
      %v956 = vmul.f32 %v938, %v954
      %v957 = vxor.u32 %v919, 2147483648
      %v958 = vmul.f32 %v957, 1.442695
      %v959 = vpow.pop %v958
      %v960 = vadd.f32 %v959, 1.0
      %v961 = vrcp.pop %v960
      %v962 = vmul.f32 %v960, %v961
      %v963 = vsub.f32 1.0, %v962
      %v964 = vmul.f32 %v961, %v963
      %v965 = vadd.f32 %v961, %v964
      %vm966 = vweird.f32 %v960
      %vm967 = vweird.f32 %v961
      %vm968 = vmor %vm966, %vm967
      %v969 = vsel %vm968, %v961, %v965
      %v970 = vand.u32 2147483647, %v960
      %vm971 = vcmp.eq.f32.partialorder %v970, 8.507059e+37
      %v972 = vand.u32 %v960, 2147483648
      %v973 = vor.u32 1.1754944e-38, %v972
      %v974 = vsel %vm971, %v973, %v969
      %v975 = vmul.f32 1.0, %v974
      %v976 = vtanh.pop %v919
      %v977 = vmul.f32 %v975, %v846
      %979 = vrot.lane.b32.xlu0 %v976, 64
      %v980 = vpop.permute.xlu0 %979
      %v982 = vmul.f32 %v975, %v980
      %984 = vrot.lane.b32.xlu0 %v982, 32
      %v985 = vpop.permute.xlu0 %984
      %v987 = vadd.f32 %v977, %v985
      %v988 = vtanh.pop %v987
      %990 = vrot.lane.b32.xlu0 %v988, 64
      %v991 = vpop.permute.xlu0 %990
      %v993 = vmul.f32 %v975, %v991
      %995 = vrot.lane.b32.xlu0 %v956, 32
      %v996 = vpop.permute.xlu0 %995
      %s998 = scalar_lea.vmem [#allocation4], %s847
      %999 = vst.msk [vmem:[%s998] sm:$0xff] %vm604, %v996
      %1001 = vrot.lane.b32.xlu0 %v993, 32
      %v1002 = vpop.permute.xlu0 %1001
      %s1004 = scalar_lea.vmem [#allocation5], %s849
      %1005 = vst.msk [vmem:[%s1004] sm:$0xff] %vm604, %v1002
    $region93: #{tpu_custom_call.1} parent=1 // loop_footer
      %s842 = sadd.s32 1, %s838
    $region94: #{tpu_custom_call.1} parent=1 // loop_footer_branch
      %837 = sbr.rel target = $region90
    $region95: #{tpu_custom_call.1} parent=1 // loop_exit
      _
    %v1006 = vld [vmem:[#allocation4] sm:$0xff]
    %v1007 = vld [vmem:[#allocation4 + $0x8] sm:$0xff]
    %v1008 = vld [vmem:[#allocation4 + $0x10] sm:$0xff]
    %v1009 = vld [vmem:[#allocation4 + $0x18] sm:$0xff]
    %v1010 = vld [vmem:[#allocation4 + $0x20] sm:$0xff]
    %v1011 = vld [vmem:[#allocation4 + $0x28] sm:$0xff]
    %v1012 = vld [vmem:[#allocation4 + $0x30] sm:$0xff]
    %v1013 = vld [vmem:[#allocation4 + $0x38] sm:$0xff]
    %v1014 = vpack.c.bf16 %v1006, %v1006
    %v1015 = vpack.c.bf16 %v1007, %v1007
    %v1016 = vpack.c.bf16 %v1008, %v1008
    %v1017 = vpack.c.bf16 %v1009, %v1009
    %v1018 = vpack.c.bf16 %v1010, %v1010
    %v1019 = vpack.c.bf16 %v1011, %v1011
    %v1020 = vpack.c.bf16 %v1012, %v1012
    %v1021 = vpack.c.bf16 %v1013, %v1013
    %vm1022 = vcmask 257024
    %1023 = vst.msk [vmem:[%s15] sm:$0xf] %vm1022, %v1014
    %1024 = vst.msk [vmem:[%s15 + $0x4] sm:$0xf] %vm1022, %v1015
    %1025 = vst.msk [vmem:[%s15 + $0x8] sm:$0xf] %vm1022, %v1016
    %1026 = vst.msk [vmem:[%s15 + $0xc] sm:$0xf] %vm1022, %v1017
    %1027 = vst.msk [vmem:[%s15 + $0x10] sm:$0xf] %vm1022, %v1018
    %1028 = vst.msk [vmem:[%s15 + $0x14] sm:$0xf] %vm1022, %v1019
    %1029 = vst.msk [vmem:[%s15 + $0x18] sm:$0xf] %vm1022, %v1020
    %1030 = vst.msk [vmem:[%s15 + $0x1c] sm:$0xf] %vm1022, %v1021
    %v1031 = vld [vmem:[#allocation5] sm:$0xff]
    %v1032 = vld [vmem:[#allocation5 + $0x8] sm:$0xff]
    %v1033 = vld [vmem:[#allocation5 + $0x10] sm:$0xff]
    %v1034 = vld [vmem:[#allocation5 + $0x18] sm:$0xff]
    %v1035 = vld [vmem:[#allocation5 + $0x20] sm:$0xff]
    %v1036 = vld [vmem:[#allocation5 + $0x28] sm:$0xff]
    %v1037 = vld [vmem:[#allocation5 + $0x30] sm:$0xff]
    %v1038 = vld [vmem:[#allocation5 + $0x38] sm:$0xff]
    %v1039 = vpack.c.bf16 %v1031, %v1031
    %v1040 = vpack.c.bf16 %v1032, %v1032
    %v1041 = vpack.c.bf16 %v1033, %v1033
    %v1042 = vpack.c.bf16 %v1034, %v1034
    %v1043 = vpack.c.bf16 %v1035, %v1035
    %v1044 = vpack.c.bf16 %v1036, %v1036
    %v1045 = vpack.c.bf16 %v1037, %v1037
    %v1046 = vpack.c.bf16 %v1038, %v1038
    %1047 = vst.msk [vmem:[%s16] sm:$0xf] %vm1022, %v1039
    %1048 = vst.msk [vmem:[%s16 + $0x4] sm:$0xf] %vm1022, %v1040
    %1049 = vst.msk [vmem:[%s16 + $0x8] sm:$0xf] %vm1022, %v1041
    %1050 = vst.msk [vmem:[%s16 + $0xc] sm:$0xf] %vm1022, %v1042
    %1051 = vst.msk [vmem:[%s16 + $0x10] sm:$0xf] %vm1022, %v1043
    %1052 = vst.msk [vmem:[%s16 + $0x14] sm:$0xf] %vm1022, %v1044
    %1053 = vst.msk [vmem:[%s16 + $0x18] sm:$0xf] %vm1022, %v1045
    %1054 = vst.msk [vmem:[%s16 + $0x1c] sm:$0xf] %vm1022, %v1046
    // Predicated region
    $region96: #{tpu_custom_call.1} parent=1 // pred_check
      _
    $region97: #{tpu_custom_call.1} parent=1 // pred_check_branch
      %1056 = sbr.rel (0) target = $region99
    $region98: #{tpu_custom_call.1} parent=1 // pred_region
      _
    $region99: #{tpu_custom_call.1} parent=1 // pred_fallthru
      _
    // Predicated region
    $region100: #{tpu_custom_call.1} parent=1 // pred_check
      _
    $region101: #{tpu_custom_call.1} parent=1 // pred_check_branch
      %1058 = sbr.rel (0) target = $region103
    $region102: #{tpu_custom_call.1} parent=1 // pred_region
      _
    $region103: #{tpu_custom_call.1} parent=1 // pred_fallthru
      _
    // Predicated region
    $region104: #{tpu_custom_call.1} parent=1 // pred_check
      _
    $region105: #{tpu_custom_call.1} parent=1 // pred_check_branch
      %1060 = sbr.rel (0) target = $region107
    $region106: #{tpu_custom_call.1} parent=1 // pred_region
      _
    $region107: #{tpu_custom_call.1} parent=1 // pred_fallthru
      _
    // Predicated region
    $region108: #{tpu_custom_call.1} parent=1 // pred_check
      _
    $region109: #{tpu_custom_call.1} parent=1 // pred_check_branch
      %1062 = sbr.rel (0) target = $region111
    $region110: #{tpu_custom_call.1} parent=1 // pred_region
      _
    $region111: #{tpu_custom_call.1} parent=1 // pred_fallthru
      _
    %1063 = vsyncpa [#allocation7], 1
    %1064 = vsyncpa [#allocation9], 1
    %1065 = vsyncpa [#allocation12], 1

</llo_original>
